<compile_context>
chip_gen: v6e
topology: v6e:2x2x1
jax: 0.10.0
libtpu: 0.0.40
codegen_flags: <defaults>
</compile_context>

<pallas_src>
import functools

import jax
import jax.numpy as jnp
from jax.experimental import pallas as pl
from jax.experimental.pallas import tpu as pltpu

EPS = 1e-5


def _round_up(x, m):
    return ((x + m - 1) // m) * m


def _vmem_limit_bytes():
    # v5e/v6e: 128 MiB physical VMEM per core -> request 64 MiB.
    # v7x-class: 64 MiB physical -> request ~70% to leave compiler headroom.
    try:
        phys = pltpu.get_tpu_info().vmem_capacity_bytes
    except Exception:
        phys = 64 * 1024 * 1024  # conservative fallback
    return min(64 * 1024 * 1024, int(phys * 0.70))


_VMEM_LIMIT = _vmem_limit_bytes()


def _choose_tm(m):
    # Streaming kernels need 256-512 row tiles to approach the HBM roofline
    # (128-row tiles measured at ~30%).  Small slabs: one 16-aligned tile
    # (bf16 sublane packing is 16 rows).
    if m >= 2048:
        return 512
    if m >= 512:
        return 256
    return _round_up(max(m, 1), 16)


def _pad_rows(x, mp):
    m = x.shape[0]
    if m == mp:
        return x
    return jnp.pad(x, ((0, mp - m),) + ((0, 0),) * (x.ndim - 1))


# ----------------------------------------------------------------------------
# Pallas kernels
# ----------------------------------------------------------------------------
def _conv_stats_kernel(a_ref, b_ref, y_ref, stats_ref):
    # bf16 x bf16 matmul with f32 accumulate; BN sum / sum-of-squares are
    # accumulated into a resident (2, C) f32 output while the tile is still in
    # VMEM.  The grid axis MUST remain "arbitrary" (resident accumulator).
    @pl.when(pl.program_id(0) == 0)
    def _():
        stats_ref[...] = jnp.zeros_like(stats_ref)

    acc = jnp.dot(a_ref[...], b_ref[...], preferred_element_type=jnp.float32)
    y_ref[...] = acc.astype(y_ref.dtype)
    s1 = jnp.sum(acc, axis=0, keepdims=True)
    s2 = jnp.sum(acc * acc, axis=0, keepdims=True)
    stats_ref[...] += jnp.concatenate([s1, s2], axis=0)


def conv_matmul_stats(a, b, tm):
    mp, k = a.shape
    n = b.shape[1]
    return pl.pallas_call(
        _conv_stats_kernel,
        out_shape=(jax.ShapeDtypeStruct((mp, n), jnp.bfloat16),
                   jax.ShapeDtypeStruct((2, n), jnp.float32)),
        grid_spec=pltpu.PrefetchScalarGridSpec(
            num_scalar_prefetch=0,
            grid=(mp // tm,),
            in_specs=[
                pl.BlockSpec((tm, k), lambda i: (i, 0)),
                pl.BlockSpec((k, n), lambda i: (0, 0)),
            ],
            out_specs=[
                pl.BlockSpec((tm, n), lambda i: (i, 0)),
                pl.BlockSpec((2, n), lambda i: (0, 0)),
            ],
        ),
        compiler_params=pltpu.CompilerParams(
            dimension_semantics=("arbitrary",), vmem_limit_bytes=_VMEM_LIMIT),
    )(a, b)


def _bn_apply_kernel(x_ref, scale_ref, shift_ref, o_ref, *, relu):
    y = x_ref[...].astype(jnp.float32) * scale_ref[...] + shift_ref[...]
    if relu:
        y = jnp.maximum(y, 0.0)
    o_ref[...] = y.astype(o_ref.dtype)


def _bn_apply_res_kernel(x_ref, scale_ref, shift_ref, res_ref, o_ref):
    y = (x_ref[...].astype(jnp.float32) * scale_ref[...] + shift_ref[...]
         + res_ref[...].astype(jnp.float32))
    o_ref[...] = jnp.maximum(y, 0.0).astype(o_ref.dtype)


def bn_apply(x, scale, shift, tm, relu=True, residual=None):
    mp, c = x.shape
    scale = scale.reshape(1, c).astype(jnp.float32)
    shift = shift.reshape(1, c).astype(jnp.float32)
    row_spec = pl.BlockSpec((tm, c), lambda i: (i, 0))
    chan_spec = pl.BlockSpec((1, c), lambda i: (0, 0))
    if residual is None:
        kernel = functools.partial(_bn_apply_kernel, relu=relu)
        in_specs = [row_spec, chan_spec, chan_spec]
        args = (x, scale, shift)
    else:
        kernel = _bn_apply_res_kernel
        in_specs = [row_spec, chan_spec, chan_spec, row_spec]
        args = (x, scale, shift, residual)
    return pl.pallas_call(
        kernel,
        out_shape=jax.ShapeDtypeStruct((mp, c), jnp.bfloat16),
        grid_spec=pltpu.PrefetchScalarGridSpec(
            num_scalar_prefetch=0,
            grid=(mp // tm,),
            in_specs=in_specs,
            out_specs=row_spec,
        ),
        compiler_params=pltpu.CompilerParams(
            dimension_semantics=("parallel",), vmem_limit_bytes=_VMEM_LIMIT),
    )(*args)


def _max_reduce_kernel(w_ref, o_ref):
    o_ref[...] = jnp.max(w_ref[...], axis=0)


def max_reduce(windows, tm):
    kwin, mp, c = windows.shape
    return pl.pallas_call(
        _max_reduce_kernel,
        out_shape=jax.ShapeDtypeStruct((mp, c), jnp.bfloat16),
        grid_spec=pltpu.PrefetchScalarGridSpec(
            num_scalar_prefetch=0,
            grid=(mp // tm,),
            in_specs=[pl.BlockSpec((kwin, tm, c), lambda i: (0, i, 0))],
            out_specs=pl.BlockSpec((tm, c), lambda i: (i, 0)),
        ),
        compiler_params=pltpu.CompilerParams(
            dimension_semantics=("parallel",), vmem_limit_bytes=_VMEM_LIMIT),
    )(windows)


def _avgpool_kernel(x_ref, o_ref):
    o_ref[...] = jnp.mean(x_ref[...].astype(jnp.float32), axis=1)


def avg_pool(x):  # x: (N, H*W, C) bf16 -> (N, C) f32
    n, s, c = x.shape
    return pl.pallas_call(
        _avgpool_kernel,
        out_shape=jax.ShapeDtypeStruct((n, c), jnp.float32),
        grid_spec=pltpu.PrefetchScalarGridSpec(
            num_scalar_prefetch=0,
            grid=(1,),
            in_specs=[pl.BlockSpec((n, s, c), lambda i: (0, 0, 0))],
            out_specs=pl.BlockSpec((n, c), lambda i: (0, 0)),
        ),
        compiler_params=pltpu.CompilerParams(vmem_limit_bytes=_VMEM_LIMIT),
    )(x)


def _fc_kernel(a_ref, b_ref, bias_ref, o_ref):
    acc = jnp.dot(a_ref[...], b_ref[...], preferred_element_type=jnp.float32)
    o_ref[...] = acc + bias_ref[...]


def fc_matmul(a, b, bias):
    mp, k = a.shape
    n = b.shape[1]
    return pl.pallas_call(
        _fc_kernel,
        out_shape=jax.ShapeDtypeStruct((mp, n), jnp.float32),
        grid_spec=pltpu.PrefetchScalarGridSpec(
            num_scalar_prefetch=0,
            grid=(1,),
            in_specs=[
                pl.BlockSpec((mp, k), lambda i: (0, 0)),
                pl.BlockSpec((k, n), lambda i: (0, 0)),
                pl.BlockSpec((1, n), lambda i: (0, 0)),
            ],
            out_specs=pl.BlockSpec((mp, n), lambda i: (0, 0)),
        ),
        compiler_params=pltpu.CompilerParams(vmem_limit_bytes=_VMEM_LIMIT),
    )(a, b, bias)


# ----------------------------------------------------------------------------
# Glue: im2col, conv+BN wrapper, pooling wrappers
# ----------------------------------------------------------------------------
def _im2col(x, kh, kw, stride, pad):
    # TODO(synk): 3x3 convs still materialize a kh*kw-blown-up patch tensor in
    # HBM outside Pallas (now bf16, halving that traffic); true in-kernel tap
    # accumulation is left for a future pass.
    n, h, w, c = x.shape
    x = jnp.pad(x, ((0, 0), (pad, pad), (pad, pad), (0, 0)))
    ho = (h + 2 * pad - kh) // stride + 1
    wo = (w + 2 * pad - kw) // stride + 1
    cols = []
    for i in range(kh):
        for j in range(kw):
            cols.append(x[:, i:i + stride * ho:stride, j:j + stride * wo:stride, :])
    patches = jnp.concatenate(cols, axis=-1)
    return patches.reshape(n * ho * wo, kh * kw * c), ho, wo


def conv_bn(x, w, gamma, beta, *, stride, pad, relu=True, residual=None):
    n = x.shape[0]
    kh, kw, cin, cout = w.shape
    patches, ho, wo = _im2col(x, kh, kw, stride, pad)
    m = n * ho * wo
    k = kh * kw * cin
    kp = 128 if k < 128 else k          # pad tiny K (stem 98, 1x1-down 64) to 128 lanes
    tm = _choose_tm(m)
    mp = _round_up(m, tm)
    patches = _pad_rows(patches, mp)
    if kp != k:
        patches = jnp.pad(patches, ((0, 0), (0, kp - k)))
    wmat = w.reshape(k, cout).astype(jnp.bfloat16)
    if kp != k:
        wmat = jnp.pad(wmat, ((0, kp - k), (0, 0)))
    # fused matmul + BN batch statistics (training-mode BatchNorm; padded rows
    # are exactly zero so they contribute nothing to the sums)
    y, stats = conv_matmul_stats(patches, wmat, tm)
    mean = stats[0] / m
    var = jnp.maximum(stats[1] / m - mean * mean, 0.0)
    scale = gamma * jax.lax.rsqrt(var + EPS)
    shift = beta - mean * scale
    res_p = None
    if residual is not None:
        res_p = _pad_rows(residual.reshape(m, cout), mp)
    y = bn_apply(y, scale, shift, tm, relu=relu, residual=res_p)
    return y[:m].reshape(n, ho, wo, cout)


def max_pool_3x3_s2_p1(x):
    # TODO(synk): windows are still gathered into a (9, M, C) bf16 tensor
    # outside Pallas; the max reduction itself runs in a Pallas kernel.
    n, h, w, c = x.shape
    xp = jnp.pad(x, ((0, 0), (1, 1), (1, 1), (0, 0)),
                 constant_values=float("-inf"))
    ho = (h + 2 - 3) // 2 + 1
    wo = (w + 2 - 3) // 2 + 1
    m = n * ho * wo
    wins = []
    for i in range(3):
        for j in range(3):
            wins.append(xp[:, i:i + 2 * ho:2, j:j + 2 * wo:2, :].reshape(m, c))
    windows = jnp.stack(wins, axis=0)  # (9, M, C) bf16
    tm = _choose_tm(m)
    mp = _round_up(m, tm)
    if mp != m:
        windows = jnp.pad(windows, ((0, 0), (0, mp - m), (0, 0)),
                          constant_values=float("-inf"))
    out = max_reduce(windows, tm)
    return out[:m].reshape(n, ho, wo, c)


# ----------------------------------------------------------------------------
# Parameters (deterministic init) + model forward
# ----------------------------------------------------------------------------
def make_conv_bn_params(key, kh, kw, cin, cout):
    w = jax.random.normal(key, (kh, kw, cin, cout), jnp.float32) * jnp.sqrt(
        2.0 / (kh * kw * cin))
    return {
        "w": w,                                   # conv bias removed: BN absorbs it
        "gamma": jnp.ones((cout,), jnp.float32),
        "beta": jnp.zeros((cout,), jnp.float32),
    }


def make_block_params(key, inplanes, planes, stride):
    k1, k2, k3 = jax.random.split(key, 3)
    p = {
        "conv1": make_conv_bn_params(k1, 3, 3, inplanes, planes),
        "conv2": make_conv_bn_params(k2, 3, 3, planes, planes),
        "stride": stride,
    }
    if stride != 1 or inplanes != planes:
        p["downsample"] = make_conv_bn_params(k3, 1, 1, inplanes, planes)
    return p


def make_model_params(key, layers, num_classes):
    keys = jax.random.split(key, 8)
    params = {"stem": make_conv_bn_params(keys[0], 7, 7, 2, 64)}
    inplanes = 64
    all_layers = []
    for idx, (planes, nblocks, stride) in enumerate(
            zip([64, 128, 256, 512], layers, [1, 2, 2, 2])):
        bkeys = jax.random.split(keys[1 + idx], nblocks)
        blocks = []
        for bi in range(nblocks):
            s = stride if bi == 0 else 1
            blocks.append(make_block_params(bkeys[bi], inplanes, planes, s))
            inplanes = planes
        all_layers.append(blocks)
    params["layers"] = all_layers
    params["fc_w"] = jax.random.normal(
        keys[5], (512, num_classes), jnp.float32) * jnp.sqrt(1.0 / 512)
    params["fc_b"] = jnp.zeros((num_classes,), jnp.float32)
    return params


def basic_block_fwd(x, p):
    stride = p["stride"]
    if "downsample" in p:
        d = p["downsample"]
        identity = conv_bn(x, d["w"], d["gamma"], d["beta"],
                           stride=stride, pad=0, relu=False)
    else:
        identity = x
    c1 = p["conv1"]
    out = conv_bn(x, c1["w"], c1["gamma"], c1["beta"],
                  stride=stride, pad=1, relu=True)
    c2 = p["conv2"]
    # second conv: BN, then residual add + ReLU fused in the Pallas epilogue kernel
    out = conv_bn(out, c2["w"], c2["gamma"], c2["beta"],
                  stride=1, pad=1, relu=False, residual=identity)
    return out


def resnet_forward(params, x_nchw):
    # NCHW -> NHWC, bf16 activations end-to-end (BN math stays f32)
    x = jnp.transpose(x_nchw, (0, 2, 3, 1)).astype(jnp.bfloat16)
    s = params["stem"]
    x = conv_bn(x, s["w"], s["gamma"], s["beta"],
                stride=2, pad=3, relu=True)           # (N,112,112,64)
    x = max_pool_3x3_s2_p1(x)                         # (N, 56, 56,64)
    for blocks in params["layers"]:
        for bp in blocks:
            x = basic_block_fwd(x, bp)                # -> (N,7,7,512)
    n, h, w, c = x.shape
    feats = avg_pool(x.reshape(n, h * w, c))          # (N,512) f32  (AvgPool2d(7))
    num_classes = params["fc_w"].shape[1]
    npad = _round_up(max(num_classes, 1), 128)        # lane-friendly FC output width
    fc_w = jnp.pad(params["fc_w"],
                   ((0, 0), (0, npad - num_classes))).astype(jnp.bfloat16)
    fc_b = jnp.pad(params["fc_b"], ((0, npad - num_classes),)).reshape(1, npad)
    mp = _round_up(n, 16)
    a = _pad_rows(feats, mp).astype(jnp.bfloat16)
    logits = fc_matmul(a, fc_w, fc_b)
    return logits[:n, :num_classes]                   # (N, num_classes)


if __name__ == "__main__":
    key = jax.random.PRNGKey(0)
    kx, kp = jax.random.split(key)
    # nn.Conv2d(in_channels=2, ...) + AvgPool2d(7) + Linear(512, ...) imply 2x224x224 inputs.
    x = jax.random.normal(kx, (2, 2, 224, 224), jnp.float32)
    params = make_model_params(kp, layers=[1, 1, 1, 1], num_classes=2)
    logits = jax.block_until_ready(resnet_forward(params, x))
    assert logits.shape == (2, 2), logits.shape
    assert bool(jnp.all(jnp.isfinite(logits)))
    print("KERNEL_OK")
</pallas_src>

<mosaic_0001>
module attributes {stable_mosaic.version = 11 : i64} {
  func.func @_conv_stats_kernel(%arg0: i32, %arg1: memref<512x128xbf16, #tpu.memory_space<vmem>>, %arg2: memref<128x64xbf16, #tpu.memory_space<vmem>>, %arg3: memref<512x64xbf16, #tpu.memory_space<vmem>>, %arg4: memref<2x64xf32, #tpu.memory_space<vmem>>) attributes {dimension_semantics = [#tpu.dimension_semantics<arbitrary>], iteration_bounds = array<i64: 49>, scalar_prefetch = 0 : i64, scratch_operands = 0 : i64, tpu.core_type = #tpu.core_type<tc>, window_params = [{transform_indices = @transform_0, window_bounds = array<i64: 512, 128>}, {pipeline_mode = #tpu.pipeline_mode<synchronous>, transform_indices = @transform_1, window_bounds = array<i64: 128, 64>}, {transform_indices = @transform_2, window_bounds = array<i64: 512, 64>}, {pipeline_mode = #tpu.pipeline_mode<synchronous>, transform_indices = @transform_3, window_bounds = array<i64: 2, 64>}]} {
    %c0_i32 = arith.constant 0 : i32
    %0 = arith.cmpi eq, %arg0, %c0_i32 : i32
    %1 = arith.extui %0 : i1 to i32
    %c0_i32_0 = arith.constant 0 : i32
    %2 = arith.cmpi ne, %1, %c0_i32_0 : i32
    scf.if %2 {
      %cst_12 = arith.constant 0.000000e+00 : f32
      %17 = vector.broadcast %cst_12 : f32 to vector<2x64xf32>
      %c0_13 = arith.constant 0 : index
      %c0_14 = arith.constant 0 : index
      %18 = vector.load %arg4[%c0_13, %c0_14] : memref<2x64xf32, #tpu.memory_space<vmem>>, vector<2x64xf32>
      tpu.vector_store %arg4[%c0_13, %c0_14], %17 {strides = array<i32>} : memref<2x64xf32, #tpu.memory_space<vmem>>, vector<2x64xf32>,
    } else {
    }
    %c0 = arith.constant 0 : index
    %c0_1 = arith.constant 0 : index
    %3 = vector.load %arg1[%c0, %c0_1] : memref<512x128xbf16, #tpu.memory_space<vmem>>, vector<512x128xbf16>
    %c0_2 = arith.constant 0 : index
    %c0_3 = arith.constant 0 : index
    %4 = vector.load %arg2[%c0_2, %c0_3] : memref<128x64xbf16, #tpu.memory_space<vmem>>, vector<128x64xbf16>
    %cst = arith.constant dense<0.000000e+00> : vector<512x64xf32>
    %5 = tpu.matmul %3, %4, %cst {dimension_numbers = #tpu.dot_dimension_numbers<[1], [0], [0], [1], [0, 0, 1, 1], [], []>} : vector<512x128xbf16>, vector<128x64xbf16>, vector<512x64xf32> -> vector<512x64xf32>
    %6 = arith.truncf %5 : vector<512x64xf32> to vector<512x64xbf16>
    %c0_4 = arith.constant 0 : index
    %c0_5 = arith.constant 0 : index
    %7 = vector.load %arg3[%c0_4, %c0_5] : memref<512x64xbf16, #tpu.memory_space<vmem>>, vector<512x64xbf16>
    tpu.vector_store %arg3[%c0_4, %c0_5], %6 {strides = array<i32>} : memref<512x64xbf16, #tpu.memory_space<vmem>>, vector<512x64xbf16>,
    %cst_6 = arith.constant dense<0.000000e+00> : vector<64xf32>
    %8 = vector.multi_reduction <add>, %5, %cst_6 [0] : vector<512x64xf32> to vector<64xf32>
    %9 = vector.shape_cast %8 : vector<64xf32> to vector<1x64xf32>
    %10 = arith.mulf %5, %5 : vector<512x64xf32>
    %cst_7 = arith.constant dense<0.000000e+00> : vector<64xf32>
    %11 = vector.multi_reduction <add>, %10, %cst_7 [0] : vector<512x64xf32> to vector<64xf32>
    %12 = vector.shape_cast %11 : vector<64xf32> to vector<1x64xf32>
    %c0_8 = arith.constant 0 : index
    %c0_9 = arith.constant 0 : index
    %13 = vector.load %arg4[%c0_8, %c0_9] : memref<2x64xf32, #tpu.memory_space<vmem>>, vector<2x64xf32>
    %14 = tpu.concatenate %9, %12 in 0 : vector<1x64xf32>, vector<1x64xf32> -> vector<2x64xf32>
    %15 = arith.addf %13, %14 : vector<2x64xf32>
    %c0_10 = arith.constant 0 : index
    %c0_11 = arith.constant 0 : index
    %16 = vector.load %arg4[%c0_10, %c0_11] : memref<2x64xf32, #tpu.memory_space<vmem>>, vector<2x64xf32>
    tpu.vector_store %arg4[%c0_10, %c0_11], %15 {strides = array<i32>} : memref<2x64xf32, #tpu.memory_space<vmem>>, vector<2x64xf32>,
    return
  }
  func.func @transform_0(%arg0: i32) -> (i32, i32) {
    %c0_i32 = arith.constant 0 : i32
    %c0_i32_0 = arith.constant 0 : i32
    return %arg0, %c0_i32 : i32, i32
  }
  func.func @transform_1(%arg0: i32) -> (i32, i32) {
    %c0_i32 = arith.constant 0 : i32
    %c0_i32_0 = arith.constant 0 : i32
    %c0_i32_1 = arith.constant 0 : i32
    return %c0_i32, %c0_i32_0 : i32, i32
  }
  func.func @transform_2(%arg0: i32) -> (i32, i32) {
    %c0_i32 = arith.constant 0 : i32
    %c0_i32_0 = arith.constant 0 : i32
    return %arg0, %c0_i32 : i32, i32
  }
  func.func @transform_3(%arg0: i32) -> (i32, i32) {
    %c0_i32 = arith.constant 0 : i32
    %c0_i32_0 = arith.constant 0 : i32
    %c0_i32_1 = arith.constant 0 : i32
    return %c0_i32, %c0_i32_0 : i32, i32
  }
}

</mosaic_0001>

<llo_original>
// kernel: tpu_custom_call.1
$region0: #{tpu_custom_call.1}
  #allocation0 [shape = 'u32[]', space=smem, size = 0x4, offset = 0x4, fixed_abs, tag = 'smem constant byte address 0x4 - core index']
  #allocation1 [shape = 'u32[144,128]{1,0:T(1,128)}', space=vmem, size = 0x12000, scoped, tag = 'internal scratch']
  %s0 = inlined_call_operand.hbm [shape: bf16[25088,128], index: 0, kind: input, shape index: {}]
  %s1 = inlined_call_operand.vmem [shape: bf16[128,64], index: 1, kind: input, shape index: {}]
  %s2 = inlined_call_operand.vmem [shape: bf16[25088,64], index: 2, kind: output, shape index: {0}]
  %s3 = inlined_call_operand.hbm [shape: f32[2,64], index: 3, kind: output, shape index: {1}]
  %4 = xla_tuple %s2, %s3
  %s5 = sld [smem:[#allocation0]]
  $region57: #{tpu_custom_call.1} parent=0
    _
  %s7 = ssub.s32 1, %s5
  %s8 = scalar_select 0, %s7, %s5
  $region1: #{tpu_custom_call.1} parent=0
    #allocation2 [shape = 'u8[262144]{0}', space=vmem, size = 0x40000, scoped, tag = 'input window, operand 0']
    #allocation3 [shape = 's32[2]{0}', space=sflag, size = 0x8, scoped, tag = 'scoped memory for tpu_custom_call.1']
    #allocation4 [shape = 's32[2]{0}', space=sflag, size = 0x8, scoped, tag = 'scoped memory for tpu_custom_call.1']
    #allocation5 [shape = 'u8[1024]{0}', space=vmem, size = 0x400, scoped, tag = 'output window, operand 1, single buffered']
    %9 = vsyncpa [#allocation3], 0
    %s10 = scalar_lea.sflag [#allocation3], 1
    %11 = vsyncpa %s10, 0
    %12 = vsyncpa [#allocation4], 0
    loop: start=0, step=1, limit=51
    $region2: #{tpu_custom_call.1} parent=1 // loop_pre_header
      _
    $region3: #{tpu_custom_call.1} parent=1 // loop_header
      %s14 = sphi 0, %s18
      %p15 = scmp.ge.s32.totalorder %s14, 51
      %s24 = sphi 0, %s26
      %s27 = sphi 0, %s24
      %s28 = sphi 0, %s27
      %s44 = sphi 0, %s28
      %s48 = sphi 0, %s48
      %s50 = sphi 0, %s48
      %s51 = sphi 0, %s50
      %s65 = sphi 0, %s51
      %s71 = sphi 0, %s73
      %s74 = sphi 0, %s71
      %s75 = sphi 0, %s74
      %s91 = sphi 0, %s75
      %s95 = sphi 0, %s95
      %s97 = sphi 0, %s95
      %s98 = sphi 0, %s97
      %s112 = sphi 0, %s98
    $region4: #{tpu_custom_call.1} parent=1 // loop_header_branch
      %17 = sbr.rel (%p15) target = $region8
    $region5: #{tpu_custom_call.1} parent=1 // loop_body
      %s19 = ssub.s32 %s14, 1
      %s20 = ssub.s32 %s14, 2
      %s21 = sadd.s32 %s14, 1
      %s22 = ssub.s32 %s14, %s21
      %p23 = scmp.eq.s32.totalorder %s22, 0
      %s25 = sadd.s32 %s24, 1
      %s26 = scalar_select %p23, %s24, %s25
      %p29 = pneg %p23
      %p30 = scmp.eq.s32.totalorder %s14, 48
      %p31 = por %p29, %p30
      %p32 = scmp.ne.s32.totalorder %s24, %s27
      %p33 = scmp.eq.s32.totalorder %s14, 0
      %p34 = por %p32, %p33
      %p35 = scmp.ne.s32.totalorder %s24, %s27
      %p36 = scmp.eq.s32.totalorder %s19, 48
      %p37 = por %p35, %p36
      %p38 = scmp.ne.s32.totalorder %s27, %s28
      %p39 = scmp.eq.s32.totalorder %s19, 0
      %p40 = por %p38, %p39
      %p41 = scmp.ne.s32.totalorder %s27, %s28
      %p42 = scmp.eq.s32.totalorder %s20, 48
      %p43 = por %p41, %p42
      %p45 = scmp.ne.s32.totalorder %s28, %s44
      %p46 = scmp.eq.s32.totalorder %s20, 0
      %p47 = por %p45, %p46
      %s49 = sadd.s32 %s48, 1
      %p52 = scmp.eq.s32.totalorder %s14, 48
      %p53 = scmp.ne.s32.totalorder %s48, %s50
      %p54 = scmp.eq.s32.totalorder %s14, 0
      %p55 = por %p53, %p54
      %p56 = scmp.ne.s32.totalorder %s48, %s50
      %p57 = scmp.eq.s32.totalorder %s19, 48
      %p58 = por %p56, %p57
      %p59 = scmp.ne.s32.totalorder %s50, %s51
      %p60 = scmp.eq.s32.totalorder %s19, 0
      %p61 = por %p59, %p60
      %p62 = scmp.ne.s32.totalorder %s50, %s51
      %p63 = scmp.eq.s32.totalorder %s20, 48
      %p64 = por %p62, %p63
      %p66 = scmp.ne.s32.totalorder %s51, %s65
      %p67 = scmp.eq.s32.totalorder %s20, 0
      %p68 = por %p66, %p67
      %s69 = ssub.s32 %s14, %s21
      %p70 = scmp.eq.s32.totalorder %s69, 0
      %s72 = sadd.s32 %s71, 1
      %s73 = scalar_select %p70, %s71, %s72
      %p76 = pneg %p70
      %p77 = scmp.eq.s32.totalorder %s14, 48
      %p78 = por %p76, %p77
      %p79 = scmp.ne.s32.totalorder %s71, %s74
      %p80 = scmp.eq.s32.totalorder %s14, 0
      %p81 = por %p79, %p80
      %p82 = scmp.ne.s32.totalorder %s71, %s74
      %p83 = scmp.eq.s32.totalorder %s19, 48
      %p84 = por %p82, %p83
      %p85 = scmp.ne.s32.totalorder %s74, %s75
      %p86 = scmp.eq.s32.totalorder %s19, 0
      %p87 = por %p85, %p86
      %p88 = scmp.ne.s32.totalorder %s74, %s75
      %p89 = scmp.eq.s32.totalorder %s20, 48
      %p90 = por %p88, %p89
      %p92 = scmp.ne.s32.totalorder %s75, %s91
      %p93 = scmp.eq.s32.totalorder %s20, 0
      %p94 = por %p92, %p93
      %s96 = sadd.s32 %s95, 1
      %p99 = scmp.eq.s32.totalorder %s14, 48
      %p100 = scmp.ne.s32.totalorder %s95, %s97
      %p101 = scmp.eq.s32.totalorder %s14, 0
      %p102 = por %p100, %p101
      %p103 = scmp.ne.s32.totalorder %s95, %s97
      %p104 = scmp.eq.s32.totalorder %s19, 48
      %p105 = por %p103, %p104
      %p106 = scmp.ne.s32.totalorder %s97, %s98
      %p107 = scmp.eq.s32.totalorder %s19, 0
      %p108 = por %p106, %p107
      %p109 = scmp.ne.s32.totalorder %s97, %s98
      %p110 = scmp.eq.s32.totalorder %s20, 48
      %p111 = por %p109, %p110
      %p113 = scmp.ne.s32.totalorder %s98, %s112
      %p114 = scmp.eq.s32.totalorder %s20, 0
      %p115 = por %p113, %p114
      %p116 = scmp.le.s32.totalorder 1, %s14
      %p117 = scmp.lt.s32.totalorder %s14, 50
      %p118 = pnand %p116, %p117
      %p119 = pneg %p118
      // Predicated region
      $region9: #{tpu_custom_call.1} parent=5 // pred_check
        _
      $region10: #{tpu_custom_call.1} parent=5 // pred_check_branch
        %121 = sbr.rel (%p118) target = $region12
      $region11: #{tpu_custom_call.1} parent=5 // pred_region
        %s122 = ssub.s32 %s14, 1
        // Predicated region
        $region13: #{tpu_custom_call.1} parent=11 // pred_check
          %p123 = pneg %p61
        $region14: #{tpu_custom_call.1} parent=11 // pred_check_branch
          %125 = sbr.rel (%p123) target = $region16
        $region15: #{tpu_custom_call.1} parent=11 // pred_region
          _
        $region16: #{tpu_custom_call.1} parent=11 // pred_fallthru
          _
      $region12: #{tpu_custom_call.1} parent=5 // pred_fallthru
        _
      %p126 = scmp.lt.s32.totalorder %s14, 49
      // Predicated region
      $region17: #{tpu_custom_call.1} parent=5 // pred_check
        %p127 = pneg %p126
      $region18: #{tpu_custom_call.1} parent=5 // pred_check_branch
        %129 = sbr.rel (%p127) target = $region20
      $region19: #{tpu_custom_call.1} parent=5 // pred_region
        // Predicated region
        $region21: #{tpu_custom_call.1} parent=19 // pred_check
          %p130 = pneg %p34
        $region22: #{tpu_custom_call.1} parent=19 // pred_check_branch
          %132 = sbr.rel (%p130) target = $region24
        $region23: #{tpu_custom_call.1} parent=19 // pred_region
          %s133 = sand.u32 %s24, 1
          %s134 = scalar_lea.sflag [#allocation3], %s133
          %s135 = sand.u32 %s24, 1
          %s136 = smul.addr %s135, 256
          %s137 = scalar_lea.vmem [#allocation2], %s136
          %s138 = smul.u32 64, %s14
          %s140 = ssub.s32 4096, 4096
          %141 = vsyncadd %s134, %s140
          %s142 = smul.addr %s138, 64
          %s143 = scalar_lea.hbm %s0, %s142
          %s144 = sshll.u32 %s137, 4
          %s145 = int_to_ptr.vmem [resolvable:$true] %s144
          %150 = dma.hbm_to_vmem [thread:$0]  %s143, 4096, %s145, %s134, 64, 64, 4
        $region24: #{tpu_custom_call.1} parent=19 // pred_fallthru
          _
      $region20: #{tpu_custom_call.1} parent=5 // pred_fallthru
        _
      %p151 = scmp.le.s32.totalorder 1, %s14
      %p152 = scmp.lt.s32.totalorder %s14, 50
      %p153 = pnand %p151, %p152
      %p154 = pneg %p153
      // Predicated region
      $region25: #{tpu_custom_call.1} parent=5 // pred_check
        _
      $region26: #{tpu_custom_call.1} parent=5 // pred_check_branch
        %156 = sbr.rel (%p153) target = $region28
      $region27: #{tpu_custom_call.1} parent=5 // pred_region
        %s157 = ssub.s32 %s14, 1
        %s158 = sand.u32 %s27, 1
        %s159 = scalar_lea.sflag [#allocation3], %s158
        %s160 = sand.u32 %s27, 1
        %s161 = smul.addr %s160, 256
        %s162 = scalar_lea.vmem [#allocation2], %s161
        // Predicated region
        $region29: #{tpu_custom_call.1} parent=27 // pred_check
          %p163 = pneg %p40
        $region30: #{tpu_custom_call.1} parent=27 // pred_check_branch
          %165 = sbr.rel (%p163) target = $region32
        $region31: #{tpu_custom_call.1} parent=27 // pred_region
          %166 = dma.done %s159, 4096
        $region32: #{tpu_custom_call.1} parent=27 // pred_fallthru
          _
        %s167 = sand.u32 %s27, 1
        %s168 = scalar_lea.sflag [#allocation3], %s167
        %s169 = sand.u32 %s27, 1
        %s170 = smul.addr %s169, 256
        %s171 = scalar_lea.vmem [#allocation2], %s170
        %p172 = pneg %p40
        %p173 = pneg %p37
        %p174 = pneg %p61
        %p175 = pneg %p58
        %p176 = pneg %p87
        %p177 = pneg %p84
        %s178 = smul.u32 64, %s19
        %p179 = scmp.lt.s32.totalorder %s178, 3135
        %s180 = scalar_select %p179, %s178, 3135
        %s181 = smul.addr %s180, 4
        %s182 = scalar_lea.vmem %s2, %s181
        %p183 = pneg %p108
        %p184 = pneg %p105
        %s185 = smul.u32 64, %s19
        %s186 = smul.u32 64, %s19
        %p187 = scmp.lt.s32.totalorder %s186, 3135
        %s188 = scalar_select %p187, %s186, 3135
        %s189 = smul.addr %s188, 4
        %s190 = scalar_lea.vmem %s2, %s189
        %s191 = smul.u32 64, %s19
        %p193 = scmp.eq.s32.totalorder %s19, 0
        // Predicated region
        $region33: #{tpu_custom_call.1} parent=27 // pred_check
          %p194 = pneg %p193
        $region34: #{tpu_custom_call.1} parent=27 // pred_check_branch
          %196 = sbr.rel (%p194) target = $region36
        $region35: #{tpu_custom_call.1} parent=27 // pred_region
          %vm197 = vcmask 517120
          %198 = vst.msk [vmem:[#allocation5] sm:$0x3] %vm197, 0.0
        $region36: #{tpu_custom_call.1} parent=27 // pred_fallthru
          _
        %v199 = vld [vmem:[%s162] sm:$0xf]
        %v200 = vld [vmem:[%s162 + $0x4] sm:$0xf]
        %v201 = vld [vmem:[%s162 + $0x8] sm:$0xf]
        %v202 = vld [vmem:[%s162 + $0xc] sm:$0xf]
        %v203 = vld [vmem:[%s162 + $0x10] sm:$0xf]
        %v204 = vld [vmem:[%s162 + $0x14] sm:$0xf]
        %v205 = vld [vmem:[%s162 + $0x18] sm:$0xf]
        %v206 = vld [vmem:[%s162 + $0x1c] sm:$0xf]
        %v207 = vld [vmem:[%s162 + $0x20] sm:$0xf]
        %v208 = vld [vmem:[%s162 + $0x24] sm:$0xf]
        %v209 = vld [vmem:[%s162 + $0x28] sm:$0xf]
        %v210 = vld [vmem:[%s162 + $0x2c] sm:$0xf]
        %v211 = vld [vmem:[%s162 + $0x30] sm:$0xf]
        %v212 = vld [vmem:[%s162 + $0x34] sm:$0xf]
        %v213 = vld [vmem:[%s162 + $0x38] sm:$0xf]
        %v214 = vld [vmem:[%s162 + $0x3c] sm:$0xf]
        %v215 = vld [vmem:[%s162 + $0x40] sm:$0xf]
        %v216 = vld [vmem:[%s162 + $0x44] sm:$0xf]
        %v217 = vld [vmem:[%s162 + $0x48] sm:$0xf]
        %v218 = vld [vmem:[%s162 + $0x4c] sm:$0xf]
        %v219 = vld [vmem:[%s162 + $0x50] sm:$0xf]
        %v220 = vld [vmem:[%s162 + $0x54] sm:$0xf]
        %v221 = vld [vmem:[%s162 + $0x58] sm:$0xf]
        %v222 = vld [vmem:[%s162 + $0x5c] sm:$0xf]
        %v223 = vld [vmem:[%s162 + $0x60] sm:$0xf]
        %v224 = vld [vmem:[%s162 + $0x64] sm:$0xf]
        %v225 = vld [vmem:[%s162 + $0x68] sm:$0xf]
        %v226 = vld [vmem:[%s162 + $0x6c] sm:$0xf]
        %v227 = vld [vmem:[%s162 + $0x70] sm:$0xf]
        %v228 = vld [vmem:[%s162 + $0x74] sm:$0xf]
        %v229 = vld [vmem:[%s162 + $0x78] sm:$0xf]
        %v230 = vld [vmem:[%s162 + $0x7c] sm:$0xf]
        %v231 = vld [vmem:[%s162 + $0x80] sm:$0xf]
        %v232 = vld [vmem:[%s162 + $0x84] sm:$0xf]
        %v233 = vld [vmem:[%s162 + $0x88] sm:$0xf]
        %v234 = vld [vmem:[%s162 + $0x8c] sm:$0xf]
        %v235 = vld [vmem:[%s162 + $0x90] sm:$0xf]
        %v236 = vld [vmem:[%s162 + $0x94] sm:$0xf]
        %v237 = vld [vmem:[%s162 + $0x98] sm:$0xf]
        %v238 = vld [vmem:[%s162 + $0x9c] sm:$0xf]
        %v239 = vld [vmem:[%s162 + $0xa0] sm:$0xf]
        %v240 = vld [vmem:[%s162 + $0xa4] sm:$0xf]
        %v241 = vld [vmem:[%s162 + $0xa8] sm:$0xf]
        %v242 = vld [vmem:[%s162 + $0xac] sm:$0xf]
        %v243 = vld [vmem:[%s162 + $0xb0] sm:$0xf]
        %v244 = vld [vmem:[%s162 + $0xb4] sm:$0xf]
        %v245 = vld [vmem:[%s162 + $0xb8] sm:$0xf]
        %v246 = vld [vmem:[%s162 + $0xbc] sm:$0xf]
        %v247 = vld [vmem:[%s162 + $0xc0] sm:$0xf]
        %v248 = vld [vmem:[%s162 + $0xc4] sm:$0xf]
        %v249 = vld [vmem:[%s162 + $0xc8] sm:$0xf]
        %v250 = vld [vmem:[%s162 + $0xcc] sm:$0xf]
        %v251 = vld [vmem:[%s162 + $0xd0] sm:$0xf]
        %v252 = vld [vmem:[%s162 + $0xd4] sm:$0xf]
        %v253 = vld [vmem:[%s162 + $0xd8] sm:$0xf]
        %v254 = vld [vmem:[%s162 + $0xdc] sm:$0xf]
        %v255 = vld [vmem:[%s162 + $0xe0] sm:$0xf]
        %v256 = vld [vmem:[%s162 + $0xe4] sm:$0xf]
        %v257 = vld [vmem:[%s162 + $0xe8] sm:$0xf]
        %v258 = vld [vmem:[%s162 + $0xec] sm:$0xf]
        %v259 = vld [vmem:[%s162 + $0xf0] sm:$0xf]
        %v260 = vld [vmem:[%s162 + $0xf4] sm:$0xf]
        %v261 = vld [vmem:[%s162 + $0xf8] sm:$0xf]
        %v262 = vld [vmem:[%s162 + $0xfc] sm:$0xf]
        %v263 = vld [vmem:[%s1] sm:$0xf]
        %v264 = vld [vmem:[%s1 + $0x4] sm:$0xf]
        %v265 = vld [vmem:[%s1 + $0x8] sm:$0xf]
        %v266 = vld [vmem:[%s1 + $0xc] sm:$0xf]
        %v267 = vld [vmem:[%s1 + $0x10] sm:$0xf]
        %v268 = vld [vmem:[%s1 + $0x14] sm:$0xf]
        %v269 = vld [vmem:[%s1 + $0x18] sm:$0xf]
        %v270 = vld [vmem:[%s1 + $0x1c] sm:$0xf]
        %v271 = vld [vmem:[%s1 + $0x20] sm:$0xf]
        %v272 = vld [vmem:[%s1 + $0x24] sm:$0xf]
        %v273 = vld [vmem:[%s1 + $0x28] sm:$0xf]
        %v274 = vld [vmem:[%s1 + $0x2c] sm:$0xf]
        %v275 = vld [vmem:[%s1 + $0x30] sm:$0xf]
        %v276 = vld [vmem:[%s1 + $0x34] sm:$0xf]
        %v277 = vld [vmem:[%s1 + $0x38] sm:$0xf]
        %v278 = vld [vmem:[%s1 + $0x3c] sm:$0xf]
        %v343 = vunpack.c.l.b16 %v199
        %v344 = vunpack.c.l.b16 %v200
        %v345 = vunpack.c.l.b16 %v201
        %v346 = vunpack.c.l.b16 %v202
        %v347 = vunpack.c.l.b16 %v203
        %v348 = vunpack.c.l.b16 %v204
        %v349 = vunpack.c.l.b16 %v205
        %v350 = vunpack.c.l.b16 %v206
        %v351 = vunpack.c.l.b16 %v207
        %v352 = vunpack.c.l.b16 %v208
        %v353 = vunpack.c.l.b16 %v209
        %v354 = vunpack.c.l.b16 %v210
        %v355 = vunpack.c.l.b16 %v211
        %v356 = vunpack.c.l.b16 %v212
        %v357 = vunpack.c.l.b16 %v213
        %v358 = vunpack.c.l.b16 %v214
        %v359 = vunpack.c.l.b16 %v215
        %v360 = vunpack.c.l.b16 %v216
        %v361 = vunpack.c.l.b16 %v217
        %v362 = vunpack.c.l.b16 %v218
        %v363 = vunpack.c.l.b16 %v219
        %v364 = vunpack.c.l.b16 %v220
        %v365 = vunpack.c.l.b16 %v221
        %v366 = vunpack.c.l.b16 %v222
        %v367 = vunpack.c.l.b16 %v223
        %v368 = vunpack.c.l.b16 %v224
        %v369 = vunpack.c.l.b16 %v225
        %v370 = vunpack.c.l.b16 %v226
        %v371 = vunpack.c.l.b16 %v227
        %v372 = vunpack.c.l.b16 %v228
        %v373 = vunpack.c.l.b16 %v229
        %v374 = vunpack.c.l.b16 %v230
        %v375 = vunpack.c.l.b16 %v231
        %v376 = vunpack.c.l.b16 %v232
        %v377 = vunpack.c.l.b16 %v233
        %v378 = vunpack.c.l.b16 %v234
        %v379 = vunpack.c.l.b16 %v235
        %v380 = vunpack.c.l.b16 %v236
        %v381 = vunpack.c.l.b16 %v237
        %v382 = vunpack.c.l.b16 %v238
        %v383 = vunpack.c.l.b16 %v239
        %v384 = vunpack.c.l.b16 %v240
        %v385 = vunpack.c.l.b16 %v241
        %v386 = vunpack.c.l.b16 %v242
        %v387 = vunpack.c.l.b16 %v243
        %v388 = vunpack.c.l.b16 %v244
        %v389 = vunpack.c.l.b16 %v245
        %v390 = vunpack.c.l.b16 %v246
        %v391 = vunpack.c.l.b16 %v247
        %v392 = vunpack.c.l.b16 %v248
        %v393 = vunpack.c.l.b16 %v249
        %v394 = vunpack.c.l.b16 %v250
        %v395 = vunpack.c.l.b16 %v251
        %v396 = vunpack.c.l.b16 %v252
        %v397 = vunpack.c.l.b16 %v253
        %v398 = vunpack.c.l.b16 %v254
        %v399 = vunpack.c.l.b16 %v255
        %v400 = vunpack.c.l.b16 %v256
        %v401 = vunpack.c.l.b16 %v257
        %v402 = vunpack.c.l.b16 %v258
        %v403 = vunpack.c.l.b16 %v259
        %v404 = vunpack.c.l.b16 %v260
        %v405 = vunpack.c.l.b16 %v261
        %v406 = vunpack.c.l.b16 %v262
        %v407 = vpack.c.b16 %v344, %v343
        %v408 = vpack.c.b16 %v346, %v345
        %v409 = vpack.c.b16 %v348, %v347
        %v410 = vpack.c.b16 %v350, %v349
        %v411 = vpack.c.b16 %v352, %v351
        %v412 = vpack.c.b16 %v354, %v353
        %v413 = vpack.c.b16 %v356, %v355
        %v414 = vpack.c.b16 %v358, %v357
        %v415 = vpack.c.b16 %v360, %v359
        %v416 = vpack.c.b16 %v362, %v361
        %v417 = vpack.c.b16 %v364, %v363
        %v418 = vpack.c.b16 %v366, %v365
        %v419 = vpack.c.b16 %v368, %v367
        %v420 = vpack.c.b16 %v370, %v369
        %v421 = vpack.c.b16 %v372, %v371
        %v422 = vpack.c.b16 %v374, %v373
        %v423 = vpack.c.b16 %v376, %v375
        %v424 = vpack.c.b16 %v378, %v377
        %v425 = vpack.c.b16 %v380, %v379
        %v426 = vpack.c.b16 %v382, %v381
        %v427 = vpack.c.b16 %v384, %v383
        %v428 = vpack.c.b16 %v386, %v385
        %v429 = vpack.c.b16 %v388, %v387
        %v430 = vpack.c.b16 %v390, %v389
        %v431 = vpack.c.b16 %v392, %v391
        %v432 = vpack.c.b16 %v394, %v393
        %v433 = vpack.c.b16 %v396, %v395
        %v434 = vpack.c.b16 %v398, %v397
        %v435 = vpack.c.b16 %v400, %v399
        %v436 = vpack.c.b16 %v402, %v401
        %v437 = vpack.c.b16 %v404, %v403
        %v438 = vpack.c.b16 %v406, %v405
        %v487 = vunpack.c.l.b16 %v263
        %v488 = vunpack.c.l.b16 %v264
        %v489 = vunpack.c.l.b16 %v265
        %v490 = vunpack.c.l.b16 %v266
        %v491 = vunpack.c.l.b16 %v267
        %v492 = vunpack.c.l.b16 %v268
        %v493 = vunpack.c.l.b16 %v269
        %v494 = vunpack.c.l.b16 %v270
        %v495 = vunpack.c.l.b16 %v271
        %v496 = vunpack.c.l.b16 %v272
        %v497 = vunpack.c.l.b16 %v273
        %v498 = vunpack.c.l.b16 %v274
        %v499 = vunpack.c.l.b16 %v275
        %v500 = vunpack.c.l.b16 %v276
        %v501 = vunpack.c.l.b16 %v277
        %v502 = vunpack.c.l.b16 %v278
        %v503 = vpack.c.b16 %v488, %v487
        %v504 = vpack.c.b16 %v490, %v489
        %v505 = vpack.c.b16 %v492, %v491
        %v506 = vpack.c.b16 %v494, %v493
        %v507 = vpack.c.b16 %v496, %v495
        %v508 = vpack.c.b16 %v498, %v497
        %v509 = vpack.c.b16 %v500, %v499
        %v510 = vpack.c.b16 %v502, %v501
        %519 = vmatprep.subr.bf16.mxu0 0
        %520 = vmatpush1.bf16.msra.mxu0 %v510
        %521 = vmatprep.subr.bf16.mxu0 0
        %522 = vmatpush1.bf16.msra.mxu0 %v509
        %523 = vmatprep.subr.bf16.mxu0 0
        %524 = vmatpush1.bf16.msra.mxu0 %v508
        %525 = vmatprep.subr.bf16.mxu0 0
        %526 = vmatpush1.bf16.msra.mxu0 %v507
        %527 = vmatprep.subr.bf16.mxu0 0
        %528 = vmatpush1.bf16.msra.mxu0 %v506
        %529 = vmatprep.subr.bf16.mxu0 0
        %530 = vmatpush1.bf16.msra.mxu0 %v505
        %531 = vmatprep.subr.bf16.mxu0 0
        %532 = vmatpush1.bf16.msra.mxu0 %v504
        %533 = vmatprep.subr.bf16.mxu0 0
        %534 = vmatpush1.bf16.msra.mxu0 %v503
        %535 = vmatprep.subr.bf16.mxu0 0
        %536 = vmatpush2.bf16.msra.mxu0 0
        %537 = vmatprep.subr.bf16.mxu0 0
        %538 = vmatpush2.bf16.msra.mxu0 0
        %539 = vmatprep.subr.bf16.mxu0 0
        %540 = vmatpush2.bf16.msra.mxu0 0
        %541 = vmatprep.subr.bf16.mxu0 0
        %542 = vmatpush2.bf16.msra.mxu0 0
        %543 = vmatprep.subr.bf16.mxu0 0
        %544 = vmatpush2.bf16.msra.mxu0 0
        %545 = vmatprep.subr.bf16.mxu0 0
        %546 = vmatpush2.bf16.msra.mxu0 0
        %547 = vmatprep.subr.bf16.mxu0 0
        %548 = vmatpush2.bf16.msra.mxu0 0
        %549 = vmatprep.subr.bf16.mxu0 0
        %550 = vmatpush2.bf16.msra.mxu0 0
        %551 = vmatprep.mubr.bf16.mxu0 0
        %552 = vmatmul.mubr.bf16.gmra.mxu0 %v407
        %v553 = vpop.f32.mrf.mxu0
        %v554 = vadd.f32 0.0, %v553
        %v555 = vpop.f32.mrf.mxu0
        %v556 = vpop.f32.mrf.mxu0
        %v557 = vadd.f32 0.0, %v556
        %v558 = vpop.f32.mrf.mxu0
        %559 = vmatprep.mubr.bf16.mxu0 0
        %560 = vmatmul.mubr.bf16.gmra.mxu0 %v408
        %v561 = vpop.f32.mrf.mxu0
        %v562 = vadd.f32 0.0, %v561
        %v563 = vpop.f32.mrf.mxu0
        %v564 = vpop.f32.mrf.mxu0
        %v565 = vadd.f32 0.0, %v564
        %v566 = vpop.f32.mrf.mxu0
        %567 = vmatprep.mubr.bf16.mxu0 0
        %568 = vmatmul.mubr.bf16.gmra.mxu0 %v409
        %v569 = vpop.f32.mrf.mxu0
        %v570 = vadd.f32 0.0, %v569
        %v571 = vpop.f32.mrf.mxu0
        %v572 = vpop.f32.mrf.mxu0
        %v573 = vadd.f32 0.0, %v572
        %v574 = vpop.f32.mrf.mxu0
        %575 = vmatprep.mubr.bf16.mxu0 0
        %576 = vmatmul.mubr.bf16.gmra.mxu0 %v410
        %v577 = vpop.f32.mrf.mxu0
        %v578 = vadd.f32 0.0, %v577
        %v579 = vpop.f32.mrf.mxu0
        %v580 = vpop.f32.mrf.mxu0
        %v581 = vadd.f32 0.0, %v580
        %v582 = vpop.f32.mrf.mxu0
        %583 = vmatprep.mubr.bf16.mxu0 0
        %584 = vmatmul.mubr.bf16.gmra.mxu0 %v411
        %v585 = vpop.f32.mrf.mxu0
        %v586 = vadd.f32 0.0, %v585
        %v587 = vpop.f32.mrf.mxu0
        %v588 = vpop.f32.mrf.mxu0
        %v589 = vadd.f32 0.0, %v588
        %v590 = vpop.f32.mrf.mxu0
        %591 = vmatprep.mubr.bf16.mxu0 0
        %592 = vmatmul.mubr.bf16.gmra.mxu0 %v412
        %v593 = vpop.f32.mrf.mxu0
        %v594 = vadd.f32 0.0, %v593
        %v595 = vpop.f32.mrf.mxu0
        %v596 = vpop.f32.mrf.mxu0
        %v597 = vadd.f32 0.0, %v596
        %v598 = vpop.f32.mrf.mxu0
        %599 = vmatprep.mubr.bf16.mxu0 0
        %600 = vmatmul.mubr.bf16.gmra.mxu0 %v413
        %v601 = vpop.f32.mrf.mxu0
        %v602 = vadd.f32 0.0, %v601
        %v603 = vpop.f32.mrf.mxu0
        %v604 = vpop.f32.mrf.mxu0
        %v605 = vadd.f32 0.0, %v604
        %v606 = vpop.f32.mrf.mxu0
        %607 = vmatprep.mubr.bf16.mxu0 0
        %608 = vmatmul.mubr.bf16.gmra.mxu0 %v414
        %v609 = vpop.f32.mrf.mxu0
        %v610 = vadd.f32 0.0, %v609
        %v611 = vpop.f32.mrf.mxu0
        %v612 = vpop.f32.mrf.mxu0
        %v613 = vadd.f32 0.0, %v612
        %v614 = vpop.f32.mrf.mxu0
        %615 = vmatprep.mubr.bf16.mxu0 0
        %616 = vmatmul.mubr.bf16.gmra.mxu0 %v415
        %v617 = vpop.f32.mrf.mxu0
        %v618 = vadd.f32 0.0, %v617
        %v619 = vpop.f32.mrf.mxu0
        %v620 = vpop.f32.mrf.mxu0
        %v621 = vadd.f32 0.0, %v620
        %v622 = vpop.f32.mrf.mxu0
        %623 = vmatprep.mubr.bf16.mxu0 0
        %624 = vmatmul.mubr.bf16.gmra.mxu0 %v416
        %v625 = vpop.f32.mrf.mxu0
        %v626 = vadd.f32 0.0, %v625
        %v627 = vpop.f32.mrf.mxu0
        %v628 = vpop.f32.mrf.mxu0
        %v629 = vadd.f32 0.0, %v628
        %v630 = vpop.f32.mrf.mxu0
        %631 = vmatprep.mubr.bf16.mxu0 0
        %632 = vmatmul.mubr.bf16.gmra.mxu0 %v417
        %v633 = vpop.f32.mrf.mxu0
        %v634 = vadd.f32 0.0, %v633
        %v635 = vpop.f32.mrf.mxu0
        %v636 = vpop.f32.mrf.mxu0
        %v637 = vadd.f32 0.0, %v636
        %v638 = vpop.f32.mrf.mxu0
        %639 = vmatprep.mubr.bf16.mxu0 0
        %640 = vmatmul.mubr.bf16.gmra.mxu0 %v418
        %v641 = vpop.f32.mrf.mxu0
        %v642 = vadd.f32 0.0, %v641
        %v643 = vpop.f32.mrf.mxu0
        %v644 = vpop.f32.mrf.mxu0
        %v645 = vadd.f32 0.0, %v644
        %v646 = vpop.f32.mrf.mxu0
        %647 = vmatprep.mubr.bf16.mxu0 0
        %648 = vmatmul.mubr.bf16.gmra.mxu0 %v419
        %v649 = vpop.f32.mrf.mxu0
        %v650 = vadd.f32 0.0, %v649
        %v651 = vpop.f32.mrf.mxu0
        %v652 = vpop.f32.mrf.mxu0
        %v653 = vadd.f32 0.0, %v652
        %v654 = vpop.f32.mrf.mxu0
        %655 = vmatprep.mubr.bf16.mxu0 0
        %656 = vmatmul.mubr.bf16.gmra.mxu0 %v420
        %v657 = vpop.f32.mrf.mxu0
        %v658 = vadd.f32 0.0, %v657
        %v659 = vpop.f32.mrf.mxu0
        %v660 = vpop.f32.mrf.mxu0
        %v661 = vadd.f32 0.0, %v660
        %v662 = vpop.f32.mrf.mxu0
        %663 = vmatprep.mubr.bf16.mxu0 0
        %664 = vmatmul.mubr.bf16.gmra.mxu0 %v421
        %v665 = vpop.f32.mrf.mxu0
        %v666 = vadd.f32 0.0, %v665
        %v667 = vpop.f32.mrf.mxu0
        %v668 = vpop.f32.mrf.mxu0
        %v669 = vadd.f32 0.0, %v668
        %v670 = vpop.f32.mrf.mxu0
        %671 = vmatprep.mubr.bf16.mxu0 0
        %672 = vmatmul.mubr.bf16.gmra.mxu0 %v422
        %v673 = vpop.f32.mrf.mxu0
        %v674 = vadd.f32 0.0, %v673
        %v675 = vpop.f32.mrf.mxu0
        %v676 = vpop.f32.mrf.mxu0
        %v677 = vadd.f32 0.0, %v676
        %v678 = vpop.f32.mrf.mxu0
        %679 = vmatprep.mubr.bf16.mxu0 0
        %680 = vmatmul.mubr.bf16.gmra.mxu0 %v423
        %v681 = vpop.f32.mrf.mxu0
        %v682 = vadd.f32 0.0, %v681
        %v683 = vpop.f32.mrf.mxu0
        %v684 = vpop.f32.mrf.mxu0
        %v685 = vadd.f32 0.0, %v684
        %v686 = vpop.f32.mrf.mxu0
        %687 = vmatprep.mubr.bf16.mxu0 0
        %688 = vmatmul.mubr.bf16.gmra.mxu0 %v424
        %v689 = vpop.f32.mrf.mxu0
        %v690 = vadd.f32 0.0, %v689
        %v691 = vpop.f32.mrf.mxu0
        %v692 = vpop.f32.mrf.mxu0
        %v693 = vadd.f32 0.0, %v692
        %v694 = vpop.f32.mrf.mxu0
        %695 = vmatprep.mubr.bf16.mxu0 0
        %696 = vmatmul.mubr.bf16.gmra.mxu0 %v425
        %v697 = vpop.f32.mrf.mxu0
        %v698 = vadd.f32 0.0, %v697
        %v699 = vpop.f32.mrf.mxu0
        %v700 = vpop.f32.mrf.mxu0
        %v701 = vadd.f32 0.0, %v700
        %v702 = vpop.f32.mrf.mxu0
        %703 = vmatprep.mubr.bf16.mxu0 0
        %704 = vmatmul.mubr.bf16.gmra.mxu0 %v426
        %v705 = vpop.f32.mrf.mxu0
        %v706 = vadd.f32 0.0, %v705
        %v707 = vpop.f32.mrf.mxu0
        %v708 = vpop.f32.mrf.mxu0
        %v709 = vadd.f32 0.0, %v708
        %v710 = vpop.f32.mrf.mxu0
        %711 = vmatprep.mubr.bf16.mxu0 0
        %712 = vmatmul.mubr.bf16.gmra.mxu0 %v427
        %v713 = vpop.f32.mrf.mxu0
        %v714 = vadd.f32 0.0, %v713
        %v715 = vpop.f32.mrf.mxu0
        %v716 = vpop.f32.mrf.mxu0
        %v717 = vadd.f32 0.0, %v716
        %v718 = vpop.f32.mrf.mxu0
        %719 = vmatprep.mubr.bf16.mxu0 0
        %720 = vmatmul.mubr.bf16.gmra.mxu0 %v428
        %v721 = vpop.f32.mrf.mxu0
        %v722 = vadd.f32 0.0, %v721
        %v723 = vpop.f32.mrf.mxu0
        %v724 = vpop.f32.mrf.mxu0
        %v725 = vadd.f32 0.0, %v724
        %v726 = vpop.f32.mrf.mxu0
        %727 = vmatprep.mubr.bf16.mxu0 0
        %728 = vmatmul.mubr.bf16.gmra.mxu0 %v429
        %v729 = vpop.f32.mrf.mxu0
        %v730 = vadd.f32 0.0, %v729
        %v731 = vpop.f32.mrf.mxu0
        %v732 = vpop.f32.mrf.mxu0
        %v733 = vadd.f32 0.0, %v732
        %v734 = vpop.f32.mrf.mxu0
        %735 = vmatprep.mubr.bf16.mxu0 0
        %736 = vmatmul.mubr.bf16.gmra.mxu0 %v430
        %v737 = vpop.f32.mrf.mxu0
        %v738 = vadd.f32 0.0, %v737
        %v739 = vpop.f32.mrf.mxu0
        %v740 = vpop.f32.mrf.mxu0
        %v741 = vadd.f32 0.0, %v740
        %v742 = vpop.f32.mrf.mxu0
        %743 = vmatprep.mubr.bf16.mxu0 0
        %744 = vmatmul.mubr.bf16.gmra.mxu0 %v431
        %v745 = vpop.f32.mrf.mxu0
        %v746 = vadd.f32 0.0, %v745
        %v747 = vpop.f32.mrf.mxu0
        %v748 = vpop.f32.mrf.mxu0
        %v749 = vadd.f32 0.0, %v748
        %v750 = vpop.f32.mrf.mxu0
        %751 = vmatprep.mubr.bf16.mxu0 0
        %752 = vmatmul.mubr.bf16.gmra.mxu0 %v432
        %v753 = vpop.f32.mrf.mxu0
        %v754 = vadd.f32 0.0, %v753
        %v755 = vpop.f32.mrf.mxu0
        %v756 = vpop.f32.mrf.mxu0
        %v757 = vadd.f32 0.0, %v756
        %v758 = vpop.f32.mrf.mxu0
        %759 = vmatprep.mubr.bf16.mxu0 0
        %760 = vmatmul.mubr.bf16.gmra.mxu0 %v433
        %v761 = vpop.f32.mrf.mxu0
        %v762 = vadd.f32 0.0, %v761
        %v763 = vpop.f32.mrf.mxu0
        %v764 = vpop.f32.mrf.mxu0
        %v765 = vadd.f32 0.0, %v764
        %v766 = vpop.f32.mrf.mxu0
        %767 = vmatprep.mubr.bf16.mxu0 0
        %768 = vmatmul.mubr.bf16.gmra.mxu0 %v434
        %v769 = vpop.f32.mrf.mxu0
        %v770 = vadd.f32 0.0, %v769
        %v771 = vpop.f32.mrf.mxu0
        %v772 = vpop.f32.mrf.mxu0
        %v773 = vadd.f32 0.0, %v772
        %v774 = vpop.f32.mrf.mxu0
        %775 = vmatprep.mubr.bf16.mxu0 0
        %776 = vmatmul.mubr.bf16.gmra.mxu0 %v435
        %v777 = vpop.f32.mrf.mxu0
        %v778 = vadd.f32 0.0, %v777
        %v779 = vpop.f32.mrf.mxu0
        %v780 = vpop.f32.mrf.mxu0
        %v781 = vadd.f32 0.0, %v780
        %v782 = vpop.f32.mrf.mxu0
        %783 = vmatprep.mubr.bf16.mxu0 0
        %784 = vmatmul.mubr.bf16.gmra.mxu0 %v436
        %v785 = vpop.f32.mrf.mxu0
        %v786 = vadd.f32 0.0, %v785
        %v787 = vpop.f32.mrf.mxu0
        %v788 = vpop.f32.mrf.mxu0
        %v789 = vadd.f32 0.0, %v788
        %v790 = vpop.f32.mrf.mxu0
        %791 = vmatprep.mubr.bf16.mxu0 0
        %792 = vmatmul.mubr.bf16.gmra.mxu0 %v437
        %v793 = vpop.f32.mrf.mxu0
        %v794 = vadd.f32 0.0, %v793
        %v795 = vpop.f32.mrf.mxu0
        %v796 = vpop.f32.mrf.mxu0
        %v797 = vadd.f32 0.0, %v796
        %v798 = vpop.f32.mrf.mxu0
        %799 = vmatprep.mubr.bf16.mxu0 0
        %800 = vmatmul.mubr.bf16.gmra.mxu0 %v438
        %v801 = vpop.f32.mrf.mxu0
        %v802 = vadd.f32 0.0, %v801
        %v803 = vpop.f32.mrf.mxu0
        %v804 = vpop.f32.mrf.mxu0
        %v805 = vadd.f32 0.0, %v804
        %v806 = vpop.f32.mrf.mxu0
        %807 = vdwg.mxu0
        %v808 = vpack.c.bf16 %v557, %v554
        %v809 = vpack.c.bf16 %v565, %v562
        %v810 = vpack.c.bf16 %v573, %v570
        %v811 = vpack.c.bf16 %v581, %v578
        %v812 = vpack.c.bf16 %v589, %v586
        %v813 = vpack.c.bf16 %v597, %v594
        %v814 = vpack.c.bf16 %v605, %v602
        %v815 = vpack.c.bf16 %v613, %v610
        %v816 = vpack.c.bf16 %v621, %v618
        %v817 = vpack.c.bf16 %v629, %v626
        %v818 = vpack.c.bf16 %v637, %v634
        %v819 = vpack.c.bf16 %v645, %v642
        %v820 = vpack.c.bf16 %v653, %v650
        %v821 = vpack.c.bf16 %v661, %v658
        %v822 = vpack.c.bf16 %v669, %v666
        %v823 = vpack.c.bf16 %v677, %v674
        %v824 = vpack.c.bf16 %v685, %v682
        %v825 = vpack.c.bf16 %v693, %v690
        %v826 = vpack.c.bf16 %v701, %v698
        %v827 = vpack.c.bf16 %v709, %v706
        %v828 = vpack.c.bf16 %v717, %v714
        %v829 = vpack.c.bf16 %v725, %v722
        %v830 = vpack.c.bf16 %v733, %v730
        %v831 = vpack.c.bf16 %v741, %v738
        %v832 = vpack.c.bf16 %v749, %v746
        %v833 = vpack.c.bf16 %v757, %v754
        %v834 = vpack.c.bf16 %v765, %v762
        %v835 = vpack.c.bf16 %v773, %v770
        %v836 = vpack.c.bf16 %v781, %v778
        %v837 = vpack.c.bf16 %v789, %v786
        %v838 = vpack.c.bf16 %v797, %v794
        %v839 = vpack.c.bf16 %v805, %v802
        %v872 = vunpack.c.l.b16 %v808
        %v873 = vunpack.c.h.b16 %v808
        %v874 = vunpack.c.l.b16 %v809
        %v875 = vunpack.c.h.b16 %v809
        %v876 = vunpack.c.l.b16 %v810
        %v877 = vunpack.c.h.b16 %v810
        %v878 = vunpack.c.l.b16 %v811
        %v879 = vunpack.c.h.b16 %v811
        %v880 = vunpack.c.l.b16 %v812
        %v881 = vunpack.c.h.b16 %v812
        %v882 = vunpack.c.l.b16 %v813
        %v883 = vunpack.c.h.b16 %v813
        %v884 = vunpack.c.l.b16 %v814
        %v885 = vunpack.c.h.b16 %v814
        %v886 = vunpack.c.l.b16 %v815
        %v887 = vunpack.c.h.b16 %v815
        %v888 = vunpack.c.l.b16 %v816
        %v889 = vunpack.c.h.b16 %v816
        %v890 = vunpack.c.l.b16 %v817
        %v891 = vunpack.c.h.b16 %v817
        %v892 = vunpack.c.l.b16 %v818
        %v893 = vunpack.c.h.b16 %v818
        %v894 = vunpack.c.l.b16 %v819
        %v895 = vunpack.c.h.b16 %v819
        %v896 = vunpack.c.l.b16 %v820
        %v897 = vunpack.c.h.b16 %v820
        %v898 = vunpack.c.l.b16 %v821
        %v899 = vunpack.c.h.b16 %v821
        %v900 = vunpack.c.l.b16 %v822
        %v901 = vunpack.c.h.b16 %v822
        %v902 = vunpack.c.l.b16 %v823
        %v903 = vunpack.c.h.b16 %v823
        %v904 = vunpack.c.l.b16 %v824
        %v905 = vunpack.c.h.b16 %v824
        %v906 = vunpack.c.l.b16 %v825
        %v907 = vunpack.c.h.b16 %v825
        %v908 = vunpack.c.l.b16 %v826
        %v909 = vunpack.c.h.b16 %v826
        %v910 = vunpack.c.l.b16 %v827
        %v911 = vunpack.c.h.b16 %v827
        %v912 = vunpack.c.l.b16 %v828
        %v913 = vunpack.c.h.b16 %v828
        %v914 = vunpack.c.l.b16 %v829
        %v915 = vunpack.c.h.b16 %v829
        %v916 = vunpack.c.l.b16 %v830
        %v917 = vunpack.c.h.b16 %v830
        %v918 = vunpack.c.l.b16 %v831
        %v919 = vunpack.c.h.b16 %v831
        %v920 = vunpack.c.l.b16 %v832
        %v921 = vunpack.c.h.b16 %v832
        %v922 = vunpack.c.l.b16 %v833
        %v923 = vunpack.c.h.b16 %v833
        %v924 = vunpack.c.l.b16 %v834
        %v925 = vunpack.c.h.b16 %v834
        %v926 = vunpack.c.l.b16 %v835
        %v927 = vunpack.c.h.b16 %v835
        %v928 = vunpack.c.l.b16 %v836
        %v929 = vunpack.c.h.b16 %v836
        %v930 = vunpack.c.l.b16 %v837
        %v931 = vunpack.c.h.b16 %v837
        %v932 = vunpack.c.l.b16 %v838
        %v933 = vunpack.c.h.b16 %v838
        %v934 = vunpack.c.l.b16 %v839
        %v935 = vunpack.c.h.b16 %v839
        %v936 = vpack.c.b16 %v872, %v872
        %v937 = vpack.c.b16 %v873, %v873
        %v938 = vpack.c.b16 %v874, %v874
        %v939 = vpack.c.b16 %v875, %v875
        %v940 = vpack.c.b16 %v876, %v876
        %v941 = vpack.c.b16 %v877, %v877
        %v942 = vpack.c.b16 %v878, %v878
        %v943 = vpack.c.b16 %v879, %v879
        %v944 = vpack.c.b16 %v880, %v880
        %v945 = vpack.c.b16 %v881, %v881
        %v946 = vpack.c.b16 %v882, %v882
        %v947 = vpack.c.b16 %v883, %v883
        %v948 = vpack.c.b16 %v884, %v884
        %v949 = vpack.c.b16 %v885, %v885
        %v950 = vpack.c.b16 %v886, %v886
        %v951 = vpack.c.b16 %v887, %v887
        %v952 = vpack.c.b16 %v888, %v888
        %v953 = vpack.c.b16 %v889, %v889
        %v954 = vpack.c.b16 %v890, %v890
        %v955 = vpack.c.b16 %v891, %v891
        %v956 = vpack.c.b16 %v892, %v892
        %v957 = vpack.c.b16 %v893, %v893
        %v958 = vpack.c.b16 %v894, %v894
        %v959 = vpack.c.b16 %v895, %v895
        %v960 = vpack.c.b16 %v896, %v896
        %v961 = vpack.c.b16 %v897, %v897
        %v962 = vpack.c.b16 %v898, %v898
        %v963 = vpack.c.b16 %v899, %v899
        %v964 = vpack.c.b16 %v900, %v900
        %v965 = vpack.c.b16 %v901, %v901
        %v966 = vpack.c.b16 %v902, %v902
        %v967 = vpack.c.b16 %v903, %v903
        %v968 = vpack.c.b16 %v904, %v904
        %v969 = vpack.c.b16 %v905, %v905
        %v970 = vpack.c.b16 %v906, %v906
        %v971 = vpack.c.b16 %v907, %v907
        %v972 = vpack.c.b16 %v908, %v908
        %v973 = vpack.c.b16 %v909, %v909
        %v974 = vpack.c.b16 %v910, %v910
        %v975 = vpack.c.b16 %v911, %v911
        %v976 = vpack.c.b16 %v912, %v912
        %v977 = vpack.c.b16 %v913, %v913
        %v978 = vpack.c.b16 %v914, %v914
        %v979 = vpack.c.b16 %v915, %v915
        %v980 = vpack.c.b16 %v916, %v916
        %v981 = vpack.c.b16 %v917, %v917
        %v982 = vpack.c.b16 %v918, %v918
        %v983 = vpack.c.b16 %v919, %v919
        %v984 = vpack.c.b16 %v920, %v920
        %v985 = vpack.c.b16 %v921, %v921
        %v986 = vpack.c.b16 %v922, %v922
        %v987 = vpack.c.b16 %v923, %v923
        %v988 = vpack.c.b16 %v924, %v924
        %v989 = vpack.c.b16 %v925, %v925
        %v990 = vpack.c.b16 %v926, %v926
        %v991 = vpack.c.b16 %v927, %v927
        %v992 = vpack.c.b16 %v928, %v928
        %v993 = vpack.c.b16 %v929, %v929
        %v994 = vpack.c.b16 %v930, %v930
        %v995 = vpack.c.b16 %v931, %v931
        %v996 = vpack.c.b16 %v932, %v932
        %v997 = vpack.c.b16 %v933, %v933
        %v998 = vpack.c.b16 %v934, %v934
        %v999 = vpack.c.b16 %v935, %v935
        %vm1064 = vcmask 519168
        %1065 = vst.msk [vmem:[%s190] sm:$0xf] %vm1064, %v936
        %1066 = vst.msk [vmem:[%s190 + $0x4] sm:$0xf] %vm1064, %v937
        %1067 = vst.msk [vmem:[%s190 + $0x8] sm:$0xf] %vm1064, %v938
        %1068 = vst.msk [vmem:[%s190 + $0xc] sm:$0xf] %vm1064, %v939
        %1069 = vst.msk [vmem:[%s190 + $0x10] sm:$0xf] %vm1064, %v940
        %1070 = vst.msk [vmem:[%s190 + $0x14] sm:$0xf] %vm1064, %v941
        %1071 = vst.msk [vmem:[%s190 + $0x18] sm:$0xf] %vm1064, %v942
        %1072 = vst.msk [vmem:[%s190 + $0x1c] sm:$0xf] %vm1064, %v943
        %1073 = vst.msk [vmem:[%s190 + $0x20] sm:$0xf] %vm1064, %v944
        %1074 = vst.msk [vmem:[%s190 + $0x24] sm:$0xf] %vm1064, %v945
        %1075 = vst.msk [vmem:[%s190 + $0x28] sm:$0xf] %vm1064, %v946
        %1076 = vst.msk [vmem:[%s190 + $0x2c] sm:$0xf] %vm1064, %v947
        %1077 = vst.msk [vmem:[%s190 + $0x30] sm:$0xf] %vm1064, %v948
        %1078 = vst.msk [vmem:[%s190 + $0x34] sm:$0xf] %vm1064, %v949
        %1079 = vst.msk [vmem:[%s190 + $0x38] sm:$0xf] %vm1064, %v950
        %1080 = vst.msk [vmem:[%s190 + $0x3c] sm:$0xf] %vm1064, %v951
        %1081 = vst.msk [vmem:[%s190 + $0x40] sm:$0xf] %vm1064, %v952
        %1082 = vst.msk [vmem:[%s190 + $0x44] sm:$0xf] %vm1064, %v953
        %1083 = vst.msk [vmem:[%s190 + $0x48] sm:$0xf] %vm1064, %v954
        %1084 = vst.msk [vmem:[%s190 + $0x4c] sm:$0xf] %vm1064, %v955
        %1085 = vst.msk [vmem:[%s190 + $0x50] sm:$0xf] %vm1064, %v956
        %1086 = vst.msk [vmem:[%s190 + $0x54] sm:$0xf] %vm1064, %v957
        %1087 = vst.msk [vmem:[%s190 + $0x58] sm:$0xf] %vm1064, %v958
        %1088 = vst.msk [vmem:[%s190 + $0x5c] sm:$0xf] %vm1064, %v959
        %1089 = vst.msk [vmem:[%s190 + $0x60] sm:$0xf] %vm1064, %v960
        %1090 = vst.msk [vmem:[%s190 + $0x64] sm:$0xf] %vm1064, %v961
        %1091 = vst.msk [vmem:[%s190 + $0x68] sm:$0xf] %vm1064, %v962
        %1092 = vst.msk [vmem:[%s190 + $0x6c] sm:$0xf] %vm1064, %v963
        %1093 = vst.msk [vmem:[%s190 + $0x70] sm:$0xf] %vm1064, %v964
        %1094 = vst.msk [vmem:[%s190 + $0x74] sm:$0xf] %vm1064, %v965
        %1095 = vst.msk [vmem:[%s190 + $0x78] sm:$0xf] %vm1064, %v966
        %1096 = vst.msk [vmem:[%s190 + $0x7c] sm:$0xf] %vm1064, %v967
        %1097 = vst.msk [vmem:[%s190 + $0x80] sm:$0xf] %vm1064, %v968
        %1098 = vst.msk [vmem:[%s190 + $0x84] sm:$0xf] %vm1064, %v969
        %1099 = vst.msk [vmem:[%s190 + $0x88] sm:$0xf] %vm1064, %v970
        %1100 = vst.msk [vmem:[%s190 + $0x8c] sm:$0xf] %vm1064, %v971
        %1101 = vst.msk [vmem:[%s190 + $0x90] sm:$0xf] %vm1064, %v972
        %1102 = vst.msk [vmem:[%s190 + $0x94] sm:$0xf] %vm1064, %v973
        %1103 = vst.msk [vmem:[%s190 + $0x98] sm:$0xf] %vm1064, %v974
        %1104 = vst.msk [vmem:[%s190 + $0x9c] sm:$0xf] %vm1064, %v975
        %1105 = vst.msk [vmem:[%s190 + $0xa0] sm:$0xf] %vm1064, %v976
        %1106 = vst.msk [vmem:[%s190 + $0xa4] sm:$0xf] %vm1064, %v977
        %1107 = vst.msk [vmem:[%s190 + $0xa8] sm:$0xf] %vm1064, %v978
        %1108 = vst.msk [vmem:[%s190 + $0xac] sm:$0xf] %vm1064, %v979
        %1109 = vst.msk [vmem:[%s190 + $0xb0] sm:$0xf] %vm1064, %v980
        %1110 = vst.msk [vmem:[%s190 + $0xb4] sm:$0xf] %vm1064, %v981
        %1111 = vst.msk [vmem:[%s190 + $0xb8] sm:$0xf] %vm1064, %v982
        %1112 = vst.msk [vmem:[%s190 + $0xbc] sm:$0xf] %vm1064, %v983
        %1113 = vst.msk [vmem:[%s190 + $0xc0] sm:$0xf] %vm1064, %v984
        %1114 = vst.msk [vmem:[%s190 + $0xc4] sm:$0xf] %vm1064, %v985
        %1115 = vst.msk [vmem:[%s190 + $0xc8] sm:$0xf] %vm1064, %v986
        %1116 = vst.msk [vmem:[%s190 + $0xcc] sm:$0xf] %vm1064, %v987
        %1117 = vst.msk [vmem:[%s190 + $0xd0] sm:$0xf] %vm1064, %v988
        %1118 = vst.msk [vmem:[%s190 + $0xd4] sm:$0xf] %vm1064, %v989
        %1119 = vst.msk [vmem:[%s190 + $0xd8] sm:$0xf] %vm1064, %v990
        %1120 = vst.msk [vmem:[%s190 + $0xdc] sm:$0xf] %vm1064, %v991
        %1121 = vst.msk [vmem:[%s190 + $0xe0] sm:$0xf] %vm1064, %v992
        %1122 = vst.msk [vmem:[%s190 + $0xe4] sm:$0xf] %vm1064, %v993
        %1123 = vst.msk [vmem:[%s190 + $0xe8] sm:$0xf] %vm1064, %v994
        %1124 = vst.msk [vmem:[%s190 + $0xec] sm:$0xf] %vm1064, %v995
        %1125 = vst.msk [vmem:[%s190 + $0xf0] sm:$0xf] %vm1064, %v996
        %1126 = vst.msk [vmem:[%s190 + $0xf4] sm:$0xf] %vm1064, %v997
        %1127 = vst.msk [vmem:[%s190 + $0xf8] sm:$0xf] %vm1064, %v998
        %1128 = vst.msk [vmem:[%s190 + $0xfc] sm:$0xf] %vm1064, %v999
        %vm1129 = vcmask 523264
        %v1130 = vsel %vm1129, %v554, 0.0
        %v1131 = vsel %vm1129, %v557, 0.0
        %v1132 = vadd.f32 %v1130, %v1131
        %v1133 = vsel %vm1129, %v562, 0.0
        %v1134 = vadd.f32 %v1132, %v1133
        %v1135 = vsel %vm1129, %v565, 0.0
        %v1136 = vadd.f32 %v1134, %v1135
        %v1137 = vsel %vm1129, %v570, 0.0
        %v1138 = vadd.f32 %v1136, %v1137
        %v1139 = vsel %vm1129, %v573, 0.0
        %v1140 = vadd.f32 %v1138, %v1139
        %v1141 = vsel %vm1129, %v578, 0.0
        %v1142 = vadd.f32 %v1140, %v1141
        %v1143 = vsel %vm1129, %v581, 0.0
        %v1144 = vadd.f32 %v1142, %v1143
        %v1145 = vsel %vm1129, %v586, 0.0
        %v1146 = vadd.f32 %v1144, %v1145
        %v1147 = vsel %vm1129, %v589, 0.0
        %v1148 = vadd.f32 %v1146, %v1147
        %v1149 = vsel %vm1129, %v594, 0.0
        %v1150 = vadd.f32 %v1148, %v1149
        %v1151 = vsel %vm1129, %v597, 0.0
        %v1152 = vadd.f32 %v1150, %v1151
        %v1153 = vsel %vm1129, %v602, 0.0
        %v1154 = vadd.f32 %v1152, %v1153
        %v1155 = vsel %vm1129, %v605, 0.0
        %v1156 = vadd.f32 %v1154, %v1155
        %v1157 = vsel %vm1129, %v610, 0.0
        %v1158 = vadd.f32 %v1156, %v1157
        %v1159 = vsel %vm1129, %v613, 0.0
        %v1160 = vadd.f32 %v1158, %v1159
        %v1161 = vsel %vm1129, %v618, 0.0
        %v1162 = vadd.f32 %v1160, %v1161
        %v1163 = vsel %vm1129, %v621, 0.0
        %v1164 = vadd.f32 %v1162, %v1163
        %v1165 = vsel %vm1129, %v626, 0.0
        %v1166 = vadd.f32 %v1164, %v1165
        %v1167 = vsel %vm1129, %v629, 0.0
        %v1168 = vadd.f32 %v1166, %v1167
        %v1169 = vsel %vm1129, %v634, 0.0
        %v1170 = vadd.f32 %v1168, %v1169
        %v1171 = vsel %vm1129, %v637, 0.0
        %v1172 = vadd.f32 %v1170, %v1171
        %v1173 = vsel %vm1129, %v642, 0.0
        %v1174 = vadd.f32 %v1172, %v1173
        %v1175 = vsel %vm1129, %v645, 0.0
        %v1176 = vadd.f32 %v1174, %v1175
        %v1177 = vsel %vm1129, %v650, 0.0
        %v1178 = vadd.f32 %v1176, %v1177
        %v1179 = vsel %vm1129, %v653, 0.0
        %v1180 = vadd.f32 %v1178, %v1179
        %v1181 = vsel %vm1129, %v658, 0.0
        %v1182 = vadd.f32 %v1180, %v1181
        %v1183 = vsel %vm1129, %v661, 0.0
        %v1184 = vadd.f32 %v1182, %v1183
        %v1185 = vsel %vm1129, %v666, 0.0
        %v1186 = vadd.f32 %v1184, %v1185
        %v1187 = vsel %vm1129, %v669, 0.0
        %v1188 = vadd.f32 %v1186, %v1187
        %v1189 = vsel %vm1129, %v674, 0.0
        %v1190 = vadd.f32 %v1188, %v1189
        %v1191 = vsel %vm1129, %v677, 0.0
        %v1192 = vadd.f32 %v1190, %v1191
        %v1193 = vsel %vm1129, %v682, 0.0
        %v1194 = vadd.f32 %v1192, %v1193
        %v1195 = vsel %vm1129, %v685, 0.0
        %v1196 = vadd.f32 %v1194, %v1195
        %v1197 = vsel %vm1129, %v690, 0.0
        %v1198 = vadd.f32 %v1196, %v1197
        %v1199 = vsel %vm1129, %v693, 0.0
        %v1200 = vadd.f32 %v1198, %v1199
        %v1201 = vsel %vm1129, %v698, 0.0
        %v1202 = vadd.f32 %v1200, %v1201
        %v1203 = vsel %vm1129, %v701, 0.0
        %v1204 = vadd.f32 %v1202, %v1203
        %v1205 = vsel %vm1129, %v706, 0.0
        %v1206 = vadd.f32 %v1204, %v1205
        %v1207 = vsel %vm1129, %v709, 0.0
        %v1208 = vadd.f32 %v1206, %v1207
        %v1209 = vsel %vm1129, %v714, 0.0
        %v1210 = vadd.f32 %v1208, %v1209
        %v1211 = vsel %vm1129, %v717, 0.0
        %v1212 = vadd.f32 %v1210, %v1211
        %v1213 = vsel %vm1129, %v722, 0.0
        %v1214 = vadd.f32 %v1212, %v1213
        %v1215 = vsel %vm1129, %v725, 0.0
        %v1216 = vadd.f32 %v1214, %v1215
        %v1217 = vsel %vm1129, %v730, 0.0
        %v1218 = vadd.f32 %v1216, %v1217
        %v1219 = vsel %vm1129, %v733, 0.0
        %v1220 = vadd.f32 %v1218, %v1219
        %v1221 = vsel %vm1129, %v738, 0.0
        %v1222 = vadd.f32 %v1220, %v1221
        %v1223 = vsel %vm1129, %v741, 0.0
        %v1224 = vadd.f32 %v1222, %v1223
        %v1225 = vsel %vm1129, %v746, 0.0
        %v1226 = vadd.f32 %v1224, %v1225
        %v1227 = vsel %vm1129, %v749, 0.0
        %v1228 = vadd.f32 %v1226, %v1227
        %v1229 = vsel %vm1129, %v754, 0.0
        %v1230 = vadd.f32 %v1228, %v1229
        %v1231 = vsel %vm1129, %v757, 0.0
        %v1232 = vadd.f32 %v1230, %v1231
        %v1233 = vsel %vm1129, %v762, 0.0
        %v1234 = vadd.f32 %v1232, %v1233
        %v1235 = vsel %vm1129, %v765, 0.0
        %v1236 = vadd.f32 %v1234, %v1235
        %v1237 = vsel %vm1129, %v770, 0.0
        %v1238 = vadd.f32 %v1236, %v1237
        %v1239 = vsel %vm1129, %v773, 0.0
        %v1240 = vadd.f32 %v1238, %v1239
        %v1241 = vsel %vm1129, %v778, 0.0
        %v1242 = vadd.f32 %v1240, %v1241
        %v1243 = vsel %vm1129, %v781, 0.0
        %v1244 = vadd.f32 %v1242, %v1243
        %v1245 = vsel %vm1129, %v786, 0.0
        %v1246 = vadd.f32 %v1244, %v1245
        %v1247 = vsel %vm1129, %v789, 0.0
        %v1248 = vadd.f32 %v1246, %v1247
        %v1249 = vsel %vm1129, %v794, 0.0
        %v1250 = vadd.f32 %v1248, %v1249
        %v1251 = vsel %vm1129, %v797, 0.0
        %v1252 = vadd.f32 %v1250, %v1251
        %v1253 = vsel %vm1129, %v802, 0.0
        %v1254 = vadd.f32 %v1252, %v1253
        %v1255 = vsel %vm1129, %v805, 0.0
        %v1256 = vadd.f32 %v1254, %v1255
        %v1257 = vrot.slane %v1256, 4
        %v1258 = vadd.f32 %v1256, %v1257
        %v1259 = vrot.slane %v1258, 2
        %v1260 = vadd.f32 %v1258, %v1259
        %v1261 = vrot.slane %v1260, 1
        %v1262 = vadd.f32 %v1260, %v1261
        %v1263 = vmul.f32 %v554, %v554
        %v1264 = vmul.f32 %v557, %v557
        %v1265 = vmul.f32 %v562, %v562
        %v1266 = vmul.f32 %v565, %v565
        %v1267 = vmul.f32 %v570, %v570
        %v1268 = vmul.f32 %v573, %v573
        %v1269 = vmul.f32 %v578, %v578
        %v1270 = vmul.f32 %v581, %v581
        %v1271 = vmul.f32 %v586, %v586
        %v1272 = vmul.f32 %v589, %v589
        %v1273 = vmul.f32 %v594, %v594
        %v1274 = vmul.f32 %v597, %v597
        %v1275 = vmul.f32 %v602, %v602
        %v1276 = vmul.f32 %v605, %v605
        %v1277 = vmul.f32 %v610, %v610
        %v1278 = vmul.f32 %v613, %v613
        %v1279 = vmul.f32 %v618, %v618
        %v1280 = vmul.f32 %v621, %v621
        %v1281 = vmul.f32 %v626, %v626
        %v1282 = vmul.f32 %v629, %v629
        %v1283 = vmul.f32 %v634, %v634
        %v1284 = vmul.f32 %v637, %v637
        %v1285 = vmul.f32 %v642, %v642
        %v1286 = vmul.f32 %v645, %v645
        %v1287 = vmul.f32 %v650, %v650
        %v1288 = vmul.f32 %v653, %v653
        %v1289 = vmul.f32 %v658, %v658
        %v1290 = vmul.f32 %v661, %v661
        %v1291 = vmul.f32 %v666, %v666
        %v1292 = vmul.f32 %v669, %v669
        %v1293 = vmul.f32 %v674, %v674
        %v1294 = vmul.f32 %v677, %v677
        %v1295 = vmul.f32 %v682, %v682
        %v1296 = vmul.f32 %v685, %v685
        %v1297 = vmul.f32 %v690, %v690
        %v1298 = vmul.f32 %v693, %v693
        %v1299 = vmul.f32 %v698, %v698
        %v1300 = vmul.f32 %v701, %v701
        %v1301 = vmul.f32 %v706, %v706
        %v1302 = vmul.f32 %v709, %v709
        %v1303 = vmul.f32 %v714, %v714
        %v1304 = vmul.f32 %v717, %v717
        %v1305 = vmul.f32 %v722, %v722
        %v1306 = vmul.f32 %v725, %v725
        %v1307 = vmul.f32 %v730, %v730
        %v1308 = vmul.f32 %v733, %v733
        %v1309 = vmul.f32 %v738, %v738
        %v1310 = vmul.f32 %v741, %v741
        %v1311 = vmul.f32 %v746, %v746
        %v1312 = vmul.f32 %v749, %v749
        %v1313 = vmul.f32 %v754, %v754
        %v1314 = vmul.f32 %v757, %v757
        %v1315 = vmul.f32 %v762, %v762
        %v1316 = vmul.f32 %v765, %v765
        %v1317 = vmul.f32 %v770, %v770
        %v1318 = vmul.f32 %v773, %v773
        %v1319 = vmul.f32 %v778, %v778
        %v1320 = vmul.f32 %v781, %v781
        %v1321 = vmul.f32 %v786, %v786
        %v1322 = vmul.f32 %v789, %v789
        %v1323 = vmul.f32 %v794, %v794
        %v1324 = vmul.f32 %v797, %v797
        %v1325 = vmul.f32 %v802, %v802
        %v1326 = vmul.f32 %v805, %v805
        %v1327 = vsel %vm1129, %v1263, 0.0
        %v1328 = vsel %vm1129, %v1264, 0.0
        %v1329 = vadd.f32 %v1327, %v1328
        %v1330 = vsel %vm1129, %v1265, 0.0
        %v1331 = vadd.f32 %v1329, %v1330
        %v1332 = vsel %vm1129, %v1266, 0.0
        %v1333 = vadd.f32 %v1331, %v1332
        %v1334 = vsel %vm1129, %v1267, 0.0
        %v1335 = vadd.f32 %v1333, %v1334
        %v1336 = vsel %vm1129, %v1268, 0.0
        %v1337 = vadd.f32 %v1335, %v1336
        %v1338 = vsel %vm1129, %v1269, 0.0
        %v1339 = vadd.f32 %v1337, %v1338
        %v1340 = vsel %vm1129, %v1270, 0.0
        %v1341 = vadd.f32 %v1339, %v1340
        %v1342 = vsel %vm1129, %v1271, 0.0
        %v1343 = vadd.f32 %v1341, %v1342
        %v1344 = vsel %vm1129, %v1272, 0.0
        %v1345 = vadd.f32 %v1343, %v1344
        %v1346 = vsel %vm1129, %v1273, 0.0
        %v1347 = vadd.f32 %v1345, %v1346
        %v1348 = vsel %vm1129, %v1274, 0.0
        %v1349 = vadd.f32 %v1347, %v1348
        %v1350 = vsel %vm1129, %v1275, 0.0
        %v1351 = vadd.f32 %v1349, %v1350
        %v1352 = vsel %vm1129, %v1276, 0.0
        %v1353 = vadd.f32 %v1351, %v1352
        %v1354 = vsel %vm1129, %v1277, 0.0
        %v1355 = vadd.f32 %v1353, %v1354
        %v1356 = vsel %vm1129, %v1278, 0.0
        %v1357 = vadd.f32 %v1355, %v1356
        %v1358 = vsel %vm1129, %v1279, 0.0
        %v1359 = vadd.f32 %v1357, %v1358
        %v1360 = vsel %vm1129, %v1280, 0.0
        %v1361 = vadd.f32 %v1359, %v1360
        %v1362 = vsel %vm1129, %v1281, 0.0
        %v1363 = vadd.f32 %v1361, %v1362
        %v1364 = vsel %vm1129, %v1282, 0.0
        %v1365 = vadd.f32 %v1363, %v1364
        %v1366 = vsel %vm1129, %v1283, 0.0
        %v1367 = vadd.f32 %v1365, %v1366
        %v1368 = vsel %vm1129, %v1284, 0.0
        %v1369 = vadd.f32 %v1367, %v1368
        %v1370 = vsel %vm1129, %v1285, 0.0
        %v1371 = vadd.f32 %v1369, %v1370
        %v1372 = vsel %vm1129, %v1286, 0.0
        %v1373 = vadd.f32 %v1371, %v1372
        %v1374 = vsel %vm1129, %v1287, 0.0
        %v1375 = vadd.f32 %v1373, %v1374
        %v1376 = vsel %vm1129, %v1288, 0.0
        %v1377 = vadd.f32 %v1375, %v1376
        %v1378 = vsel %vm1129, %v1289, 0.0
        %v1379 = vadd.f32 %v1377, %v1378
        %v1380 = vsel %vm1129, %v1290, 0.0
        %v1381 = vadd.f32 %v1379, %v1380
        %v1382 = vsel %vm1129, %v1291, 0.0
        %v1383 = vadd.f32 %v1381, %v1382
        %v1384 = vsel %vm1129, %v1292, 0.0
        %v1385 = vadd.f32 %v1383, %v1384
        %v1386 = vsel %vm1129, %v1293, 0.0
        %v1387 = vadd.f32 %v1385, %v1386
        %v1388 = vsel %vm1129, %v1294, 0.0
        %v1389 = vadd.f32 %v1387, %v1388
        %v1390 = vsel %vm1129, %v1295, 0.0
        %v1391 = vadd.f32 %v1389, %v1390
        %v1392 = vsel %vm1129, %v1296, 0.0
        %v1393 = vadd.f32 %v1391, %v1392
        %v1394 = vsel %vm1129, %v1297, 0.0
        %v1395 = vadd.f32 %v1393, %v1394
        %v1396 = vsel %vm1129, %v1298, 0.0
        %v1397 = vadd.f32 %v1395, %v1396
        %v1398 = vsel %vm1129, %v1299, 0.0
        %v1399 = vadd.f32 %v1397, %v1398
        %v1400 = vsel %vm1129, %v1300, 0.0
        %v1401 = vadd.f32 %v1399, %v1400
        %v1402 = vsel %vm1129, %v1301, 0.0
        %v1403 = vadd.f32 %v1401, %v1402
        %v1404 = vsel %vm1129, %v1302, 0.0
        %v1405 = vadd.f32 %v1403, %v1404
        %v1406 = vsel %vm1129, %v1303, 0.0
        %v1407 = vadd.f32 %v1405, %v1406
        %v1408 = vsel %vm1129, %v1304, 0.0
        %v1409 = vadd.f32 %v1407, %v1408
        %v1410 = vsel %vm1129, %v1305, 0.0
        %v1411 = vadd.f32 %v1409, %v1410
        %v1412 = vsel %vm1129, %v1306, 0.0
        %v1413 = vadd.f32 %v1411, %v1412
        %v1414 = vsel %vm1129, %v1307, 0.0
        %v1415 = vadd.f32 %v1413, %v1414
        %v1416 = vsel %vm1129, %v1308, 0.0
        %v1417 = vadd.f32 %v1415, %v1416
        %v1418 = vsel %vm1129, %v1309, 0.0
        %v1419 = vadd.f32 %v1417, %v1418
        %v1420 = vsel %vm1129, %v1310, 0.0
        %v1421 = vadd.f32 %v1419, %v1420
        %v1422 = vsel %vm1129, %v1311, 0.0
        %v1423 = vadd.f32 %v1421, %v1422
        %v1424 = vsel %vm1129, %v1312, 0.0
        %v1425 = vadd.f32 %v1423, %v1424
        %v1426 = vsel %vm1129, %v1313, 0.0
        %v1427 = vadd.f32 %v1425, %v1426
        %v1428 = vsel %vm1129, %v1314, 0.0
        %v1429 = vadd.f32 %v1427, %v1428
        %v1430 = vsel %vm1129, %v1315, 0.0
        %v1431 = vadd.f32 %v1429, %v1430
        %v1432 = vsel %vm1129, %v1316, 0.0
        %v1433 = vadd.f32 %v1431, %v1432
        %v1434 = vsel %vm1129, %v1317, 0.0
        %v1435 = vadd.f32 %v1433, %v1434
        %v1436 = vsel %vm1129, %v1318, 0.0
        %v1437 = vadd.f32 %v1435, %v1436
        %v1438 = vsel %vm1129, %v1319, 0.0
        %v1439 = vadd.f32 %v1437, %v1438
        %v1440 = vsel %vm1129, %v1320, 0.0
        %v1441 = vadd.f32 %v1439, %v1440
        %v1442 = vsel %vm1129, %v1321, 0.0
        %v1443 = vadd.f32 %v1441, %v1442
        %v1444 = vsel %vm1129, %v1322, 0.0
        %v1445 = vadd.f32 %v1443, %v1444
        %v1446 = vsel %vm1129, %v1323, 0.0
        %v1447 = vadd.f32 %v1445, %v1446
        %v1448 = vsel %vm1129, %v1324, 0.0
        %v1449 = vadd.f32 %v1447, %v1448
        %v1450 = vsel %vm1129, %v1325, 0.0
        %v1451 = vadd.f32 %v1449, %v1450
        %v1452 = vsel %vm1129, %v1326, 0.0
        %v1453 = vadd.f32 %v1451, %v1452
        %v1454 = vrot.slane %v1453, 4
        %v1455 = vadd.f32 %v1453, %v1454
        %v1456 = vrot.slane %v1455, 2
        %v1457 = vadd.f32 %v1455, %v1456
        %v1458 = vrot.slane %v1457, 1
        %v1459 = vadd.f32 %v1457, %v1458
        %v1460 = vld [vmem:[#allocation5] sm:$0x3]
        %vm1461 = vcmask 1040384
        %v1462 = vsel %vm1461, %v1262, %v1459
        %v1463 = vadd.f32 %v1460, %v1462
        %vm1464 = vcmask 517120
        %1465 = vst.msk [vmem:[#allocation5] sm:$0x3] %vm1464, %v1463
        %s1466 = smul.u32 64, %s19
        %p1467 = scmp.lt.s32.totalorder %s1466, 3135
        %s1468 = scalar_select %p1467, %s1466, 3135
        %s1469 = smul.addr %s1468, 4
        %s1470 = scalar_lea.vmem %s2, %s1469
        // Predicated region
        $region37: #{tpu_custom_call.1} parent=27 // pred_check
          %p1471 = pneg %p84
        $region38: #{tpu_custom_call.1} parent=27 // pred_check_branch
          %1473 = sbr.rel (%p1471) target = $region40
        $region39: #{tpu_custom_call.1} parent=27 // pred_region
          %s1474 = smul.u32 64, %s19
        $region40: #{tpu_custom_call.1} parent=27 // pred_fallthru
          _
        // Predicated region
        $region41: #{tpu_custom_call.1} parent=27 // pred_check
          %p1475 = pneg %p105
        $region42: #{tpu_custom_call.1} parent=27 // pred_check_branch
          %1477 = sbr.rel (%p1475) target = $region44
        $region43: #{tpu_custom_call.1} parent=27 // pred_region
          %s1479 = ssub.s32 32, 32
          %1480 = vsyncadd [#allocation4], %s1479
          %s1482 = sshll.u32 [#allocation5], 4
          %s1483 = int_to_ptr.vmem [resolvable:$true] %s1482
          %1485 = dma.vmem_to_hbm [thread:$0]  %s1483, 32, %s3, [#allocation4]
        $region44: #{tpu_custom_call.1} parent=27 // pred_fallthru
          _
        // Predicated region
        $region45: #{tpu_custom_call.1} parent=27 // pred_check
          %p1486 = pneg %p105
        $region46: #{tpu_custom_call.1} parent=27 // pred_check_branch
          %1488 = sbr.rel (%p1486) target = $region48
        $region47: #{tpu_custom_call.1} parent=27 // pred_region
          %1489 = dma.done [#allocation4], 32
        $region48: #{tpu_custom_call.1} parent=27 // pred_fallthru
          _
      $region28: #{tpu_custom_call.1} parent=5 // pred_fallthru
        _
      %p1490 = scmp.le.s32.totalorder 2, %s14
      // Predicated region
      $region49: #{tpu_custom_call.1} parent=5 // pred_check
        %p1491 = pneg %p1490
      $region50: #{tpu_custom_call.1} parent=5 // pred_check_branch
        %1493 = sbr.rel (%p1491) target = $region52
      $region51: #{tpu_custom_call.1} parent=5 // pred_region
        %s1494 = ssub.s32 %s14, 2
        // Predicated region
        $region53: #{tpu_custom_call.1} parent=51 // pred_check
          %p1495 = pneg %p90
        $region54: #{tpu_custom_call.1} parent=51 // pred_check_branch
          %1497 = sbr.rel (%p1495) target = $region56
        $region55: #{tpu_custom_call.1} parent=51 // pred_region
          %s1498 = smul.u32 64, %s20
          %p1499 = scmp.lt.s32.totalorder %s1498, 3135
          %s1500 = scalar_select %p1499, %s1498, 3135
          %s1501 = smul.addr %s1500, 4
          %s1502 = scalar_lea.vmem %s2, %s1501
        $region56: #{tpu_custom_call.1} parent=51 // pred_fallthru
          _
      $region52: #{tpu_custom_call.1} parent=5 // pred_fallthru
        _
    $region6: #{tpu_custom_call.1} parent=1 // loop_footer
      %s18 = sadd.s32 1, %s14
    $region7: #{tpu_custom_call.1} parent=1 // loop_footer_branch
      %13 = sbr.rel target = $region3
    $region8: #{tpu_custom_call.1} parent=1 // loop_exit
      _
    %1503 = vsyncpa [#allocation3], 1
    %s1504 = scalar_lea.sflag [#allocation3], 1
    %1505 = vsyncpa %s1504, 1
    %1506 = vsyncpa [#allocation4], 1
    %s1507 = scalar_lea.sflag [#allocation4], 1
    %1508 = vsyncpa %s1507, 1

</llo_original>
